<compile_context>
chip_gen: v5e
topology: v5e:2x2
jax: 0.10.0
libtpu: 0.0.40
codegen_flags: <defaults>
</compile_context>

<pallas_src>
import jax
import jax.numpy as jnp
import numpy as np
from jax import lax
from jax.experimental import pallas as pl
from jax.experimental.pallas import tpu as pltpu


def _make_decoder_kernel(H, W):
    HW = H * W

    def kernel(x_ref, w1_ref, b1_ref, wd_ref, bt_ref, mask_ref, o_ref):
        # x_ref:   (1, Cin, H*W)    one batch element, NCHW, spatial flattened
        # w1_ref:  (9, Cmid, Cin)   conv1 taps, tap index = kh*3 + kw
        # b1_ref:  (Cmid, 1)
        # wd_ref:  (9, Cout, Cmid)  deconv taps (channel-transposed), kh*3 + kw
        # bt_ref:  (Cout, 1)
        # mask_ref:(2, H*W)         [0]: column x-1 valid, [1]: column x+1 valid
        # o_ref:   (1, 4, Cout, H*W) phase-separated output, phase = 2*py + px
        f32 = jnp.float32
        Cmid = w1_ref.shape[1]

        x = x_ref[0].astype(f32)                       # (Cin, H*W)
        masks = mask_ref[...].astype(f32)              # (2, H*W)
        m_left = masks[0:1, :]                         # valid when dw == -1
        m_right = masks[1:2, :]                        # valid when dw == +1

        def shift(a, k):
            # result[:, s] = a[:, s + k] (k static), zero-filled out of range.
            c = a.shape[0]
            if k == 0:
                return a
            if k > 0:
                return jnp.concatenate(
                    [a[:, k:], jnp.zeros((c, k), a.dtype)], axis=1)
            return jnp.concatenate(
                [jnp.zeros((c, -k), a.dtype), a[:, :k]], axis=1)

        def tap(a, dh, dw):
            # a viewed as (C, H, W): t[:, y, x] = a[:, y+dh, x+dw] with zero pad.
            t = shift(a, dh * W + dw)
            if dw == -1:
                t = t * m_left
            elif dw == 1:
                t = t * m_right
            return t

        # ---- ConvRelu: Conv2d(Cin, Cmid, 3, padding=1) + ReLU --------------
        acc = jnp.broadcast_to(b1_ref[...], (Cmid, HW))           # bias in init
        for dh in (-1, 0, 1):
            for dw in (-1, 0, 1):
                wk = w1_ref[(dh + 1) * 3 + (dw + 1)]              # (Cmid, Cin)
                acc = acc + jnp.dot(wk, tap(x, dh, dw),
                                    preferred_element_type=f32)
        h = jnp.maximum(acc, 0.0)                                 # (Cmid, H*W)

        # ---- ConvTranspose2d(k=3, s=2, p=1, output_padding=1) + ReLU -------
        # 4-phase sub-pixel decomposition: out[2ty+py, 2tx+px] only uses taps
        # with matching parity -> 1 + 2 + 2 + 4 = 9 live tap-matmuls.
        h_x = tap(h, 0, 1)        # h[:, ty,   tx+1]
        h_y = tap(h, 1, 0)        # h[:, ty+1, tx  ]
        h_xy = tap(h, 1, 1)       # h[:, ty+1, tx+1]

        bt = bt_ref[...]                                          # (Cout, 1)

        def wd(kh, kw):
            return wd_ref[kh * 3 + kw]                            # (Cout, Cmid)

        def mm(wm, a):
            return jnp.dot(wm, a, preferred_element_type=f32)

        p_ee = mm(wd(1, 1), h) + bt
        p_eo = mm(wd(1, 0), h_x) + mm(wd(1, 2), h) + bt
        p_oe = mm(wd(0, 1), h_y) + mm(wd(2, 1), h) + bt
        p_oo = (mm(wd(0, 0), h_xy) + mm(wd(0, 2), h_y)
                + mm(wd(2, 0), h_x) + mm(wd(2, 2), h) + bt)

        dt = o_ref.dtype
        o_ref[0, 0] = jnp.maximum(p_ee, 0.0).astype(dt)   # (oy even, ox even)
        o_ref[0, 1] = jnp.maximum(p_eo, 0.0).astype(dt)   # (oy even, ox odd)
        o_ref[0, 2] = jnp.maximum(p_oe, 0.0).astype(dt)   # (oy odd,  ox even)
        o_ref[0, 3] = jnp.maximum(p_oo, 0.0).astype(dt)   # (oy odd,  ox odd)

    return kernel


def _decoder_pallas_call(x_flat, w1k, b1, wdk, bt, col_mask, H, W):
    N, Cin, HW = x_flat.shape
    Cmid = w1k.shape[1]
    Cout = wdk.shape[1]
    flops = 2 * N * HW * 9 * (Cin * Cmid + Cmid * Cout)
    bytes_accessed = 4 * (x_flat.size + w1k.size + b1.size + wdk.size
                          + bt.size + col_mask.size + N * 4 * Cout * HW)
    return pl.pallas_call(
        _make_decoder_kernel(H, W),
        out_shape=jax.ShapeDtypeStruct((N, 4, Cout, HW), x_flat.dtype),
        grid=(N,),
        in_specs=[
            pl.BlockSpec((1, Cin, HW), lambda n: (n, 0, 0)),
            pl.BlockSpec((9, Cmid, Cin), lambda n: (0, 0, 0)),
            pl.BlockSpec((Cmid, 1), lambda n: (0, 0)),
            pl.BlockSpec((9, Cout, Cmid), lambda n: (0, 0, 0)),
            pl.BlockSpec((Cout, 1), lambda n: (0, 0)),
            pl.BlockSpec((2, HW), lambda n: (0, 0)),
        ],
        out_specs=pl.BlockSpec((1, 4, Cout, HW), lambda n: (n, 0, 0, 0)),
        compiler_params=pltpu.CompilerParams(
            dimension_semantics=("parallel",)),
        cost_estimate=pl.CostEstimate(flops=flops, transcendentals=0,
                                      bytes_accessed=bytes_accessed),
    )(x_flat, w1k, b1, wdk, bt, col_mask)


def prepare_decoder_params(w1, b1, wt, bt):
    """PyTorch-layout weights -> kernel layout. Do this once, outside the hot path."""
    Cmid, Cin = w1.shape[0], w1.shape[1]
    Cout = wt.shape[1]
    return {
        # conv1: w1k[kh*3+kw, co, ci] = w1[co, ci, kh, kw]
        "w1k": jnp.transpose(w1, (2, 3, 0, 1)).reshape(9, Cmid, Cin),
        "b1": b1.reshape(Cmid, 1),
        # deconv: wdk[kh*3+kw, co, ci] = wt[ci, co, kh, kw]
        "wdk": jnp.transpose(wt, (2, 3, 1, 0)).reshape(9, Cout, Cmid),
        "bt": bt.reshape(Cout, 1),
    }


def decoder_block_forward(x_nchw, kp):
    """Fused DecoderBlock forward. NCHW in -> NCHW out, matches the PyTorch module."""
    N, Cin, H, W = x_nchw.shape
    Cout = kp["wdk"].shape[1]

    x_flat = x_nchw.reshape(N, Cin, H * W)            # contiguous, free
    col = jnp.arange(H * W, dtype=jnp.int32) % W      # constant-folded under jit
    col_mask = jnp.stack([col >= 1, col <= W - 2]).astype(x_nchw.dtype)  # (2, H*W)

    out = _decoder_pallas_call(x_flat, kp["w1k"], kp["b1"], kp["wdk"], kp["bt"],
                               col_mask, H, W)        # (N, 4, Cout, H*W)

    # Interleave the 4 parity phases back to NCHW: y[n, co, 2ty+py, 2tx+px].
    out = out.reshape(N, 2, 2, Cout, H, W)
    out = jnp.transpose(out, (0, 3, 4, 1, 5, 2))
    return out.reshape(N, Cout, 2 * H, 2 * W)


def decoder_block_reference(x_nchw, params):
    """Pure-JAX reference (lax convs) with PyTorch-equivalent semantics."""
    w1, b1, wt, bt = params["w1"], params["b1"], params["wt"], params["bt"]
    x = jnp.transpose(x_nchw, (0, 2, 3, 1))
    dn = ("NHWC", "HWIO", "NHWC")
    y1 = lax.conv_general_dilated(
        x, jnp.transpose(w1, (2, 3, 1, 0)), (1, 1), ((1, 1), (1, 1)),
        dimension_numbers=dn) + b1
    y1 = jnp.maximum(y1, 0.0)
    y2 = lax.conv_general_dilated(
        y1, jnp.transpose(wt[:, :, ::-1, ::-1], (2, 3, 0, 1)), (1, 1),
        ((1, 2), (1, 2)), lhs_dilation=(2, 2), dimension_numbers=dn) + bt
    y2 = jnp.maximum(y2, 0.0)
    return jnp.transpose(y2, (0, 3, 1, 2))


if __name__ == "__main__":
    N, Cin, Cmid, Cout, H, W = 2, 4, 8, 4, 16, 16

    key = jax.random.PRNGKey(0)
    k_x, k_w1, k_b1, k_wt, k_bt = jax.random.split(key, 5)
    x = jax.random.normal(k_x, (N, Cin, H, W), jnp.float32)
    params = {
        # nn.Conv2d(Cin, Cmid, 3): weight (Cmid, Cin, 3, 3), bias (Cmid,)
        "w1": 0.1 * jax.random.normal(k_w1, (Cmid, Cin, 3, 3), jnp.float32),
        "b1": 0.1 * jax.random.normal(k_b1, (Cmid,), jnp.float32),
        # nn.ConvTranspose2d(Cmid, Cout, 3): weight (Cmid, Cout, 3, 3), bias (Cout,)
        "wt": 0.1 * jax.random.normal(k_wt, (Cmid, Cout, 3, 3), jnp.float32),
        "bt": 0.1 * jax.random.normal(k_bt, (Cout,), jnp.float32),
    }

    kp = prepare_decoder_params(params["w1"], params["b1"],
                                params["wt"], params["bt"])
    fwd = jax.jit(decoder_block_forward)

    out = jax.block_until_ready(fwd(x, kp))
    assert out.shape == (N, Cout, 2 * H, 2 * W), out.shape

    ref = jax.block_until_ready(decoder_block_reference(x, params))
    assert np.allclose(np.asarray(out), np.asarray(ref), atol=1e-4, rtol=1e-4)

    print("KERNEL_OK")
</pallas_src>

<mosaic_0001>
module attributes {stable_mosaic.version = 11 : i64} {
  func.func @kernel(%arg0: i32, %arg1: memref<1x4x256xf32, #tpu.memory_space<vmem>>, %arg2: memref<9x8x4xf32, #tpu.memory_space<vmem>>, %arg3: memref<8x1xf32, #tpu.memory_space<vmem>>, %arg4: memref<9x4x8xf32, #tpu.memory_space<vmem>>, %arg5: memref<4x1xf32, #tpu.memory_space<vmem>>, %arg6: memref<2x256xf32, #tpu.memory_space<vmem>>, %arg7: memref<1x4x4x256xf32, #tpu.memory_space<vmem>>) attributes {dimension_semantics = [#tpu.dimension_semantics<parallel>], iteration_bounds = array<i64: 2>, scalar_prefetch = 0 : i64, scratch_operands = 0 : i64, tpu.core_type = #tpu.core_type<tc>, window_params = [{transform_indices = @transform_0, window_bounds = array<i64: 1, 4, 256>}, {pipeline_mode = #tpu.pipeline_mode<synchronous>, transform_indices = @transform_1, window_bounds = array<i64: 9, 8, 4>}, {pipeline_mode = #tpu.pipeline_mode<synchronous>, transform_indices = @transform_2, window_bounds = array<i64: 8, 1>}, {pipeline_mode = #tpu.pipeline_mode<synchronous>, transform_indices = @transform_3, window_bounds = array<i64: 9, 4, 8>}, {pipeline_mode = #tpu.pipeline_mode<synchronous>, transform_indices = @transform_4, window_bounds = array<i64: 4, 1>}, {pipeline_mode = #tpu.pipeline_mode<synchronous>, transform_indices = @transform_5, window_bounds = array<i64: 2, 256>}, {transform_indices = @transform_6, window_bounds = array<i64: 1, 4, 4, 256>}]} {
    %c0 = arith.constant 0 : index
    %c0_0 = arith.constant 0 : index
    %c0_1 = arith.constant 0 : index
    %0 = vector.load %arg1[%c0, %c0_0, %c0_1] : memref<1x4x256xf32, #tpu.memory_space<vmem>>, vector<1x4x256xf32>
    %1 = vector.shape_cast %0 : vector<1x4x256xf32> to vector<4x256xf32>
    %c0_2 = arith.constant 0 : index
    %c0_3 = arith.constant 0 : index
    %2 = vector.load %arg6[%c0_2, %c0_3] : memref<2x256xf32, #tpu.memory_space<vmem>>, vector<2x256xf32>
    %3 = vector.extract_strided_slice %2 {offsets = [0, 0], sizes = [1, 256], strides = [1, 1]} : vector<2x256xf32> to vector<1x256xf32>
    %4 = vector.extract_strided_slice %2 {offsets = [1, 0], sizes = [1, 256], strides = [1, 1]} : vector<2x256xf32> to vector<1x256xf32>
    %c0_4 = arith.constant 0 : index
    %c0_5 = arith.constant 0 : index
    %5 = vector.load %arg3[%c0_4, %c0_5] : memref<8x1xf32, #tpu.memory_space<vmem>>, vector<8x1xf32>
    %6 = vector.shape_cast %5 : vector<8x1xf32> to vector<8x1xf32>
    %7 = vector.broadcast %6 : vector<8x1xf32> to vector<8x256xf32>
    %c0_6 = arith.constant 0 : index
    %c0_7 = arith.constant 0 : index
    %c0_8 = arith.constant 0 : index
    %8 = vector.load %arg2[%c0_6, %c0_7, %c0_8] : memref<9x8x4xf32, #tpu.memory_space<vmem>>, vector<1x8x4xf32>
    %9 = vector.shape_cast %8 : vector<1x8x4xf32> to vector<8x4xf32>
    %cst = arith.constant 0.000000e+00 : f32
    %10 = vector.broadcast %cst : f32 to vector<4x17xf32>
    %11 = vector.extract_strided_slice %1 {offsets = [0, 0], sizes = [4, 239], strides = [1, 1]} : vector<4x256xf32> to vector<4x239xf32>
    %12 = tpu.concatenate %10, %11 in 1 : vector<4x17xf32>, vector<4x239xf32> -> vector<4x256xf32>
    %13 = vector.broadcast %3 : vector<1x256xf32> to vector<4x256xf32>
    %14 = arith.mulf %12, %13 : vector<4x256xf32>
    %cst_9 = arith.constant dense<0.000000e+00> : vector<8x256xf32>
    %15 = tpu.matmul %9, %14, %cst_9 {dimension_numbers = #tpu.dot_dimension_numbers<[1], [0], [0], [1], [0, 0, 1, 1], [], []>} : vector<8x4xf32>, vector<4x256xf32>, vector<8x256xf32> -> vector<8x256xf32>
    %16 = arith.addf %7, %15 : vector<8x256xf32>
    %c1 = arith.constant 1 : index
    %c0_10 = arith.constant 0 : index
    %c0_11 = arith.constant 0 : index
    %17 = vector.load %arg2[%c1, %c0_10, %c0_11] : memref<9x8x4xf32, #tpu.memory_space<vmem>>, vector<1x8x4xf32>
    %18 = vector.shape_cast %17 : vector<1x8x4xf32> to vector<8x4xf32>
    %cst_12 = arith.constant 0.000000e+00 : f32
    %19 = vector.broadcast %cst_12 : f32 to vector<4x16xf32>
    %20 = vector.extract_strided_slice %1 {offsets = [0, 0], sizes = [4, 240], strides = [1, 1]} : vector<4x256xf32> to vector<4x240xf32>
    %21 = tpu.concatenate %19, %20 in 1 : vector<4x16xf32>, vector<4x240xf32> -> vector<4x256xf32>
    %cst_13 = arith.constant dense<0.000000e+00> : vector<8x256xf32>
    %22 = tpu.matmul %18, %21, %cst_13 {dimension_numbers = #tpu.dot_dimension_numbers<[1], [0], [0], [1], [0, 0, 1, 1], [], []>} : vector<8x4xf32>, vector<4x256xf32>, vector<8x256xf32> -> vector<8x256xf32>
    %23 = arith.addf %16, %22 : vector<8x256xf32>
    %c2 = arith.constant 2 : index
    %c0_14 = arith.constant 0 : index
    %c0_15 = arith.constant 0 : index
    %24 = vector.load %arg2[%c2, %c0_14, %c0_15] : memref<9x8x4xf32, #tpu.memory_space<vmem>>, vector<1x8x4xf32>
    %25 = vector.shape_cast %24 : vector<1x8x4xf32> to vector<8x4xf32>
    %cst_16 = arith.constant 0.000000e+00 : f32
    %26 = vector.broadcast %cst_16 : f32 to vector<4x15xf32>
    %27 = vector.extract_strided_slice %1 {offsets = [0, 0], sizes = [4, 241], strides = [1, 1]} : vector<4x256xf32> to vector<4x241xf32>
    %28 = tpu.concatenate %26, %27 in 1 : vector<4x15xf32>, vector<4x241xf32> -> vector<4x256xf32>
    %29 = vector.broadcast %4 : vector<1x256xf32> to vector<4x256xf32>
    %30 = arith.mulf %28, %29 : vector<4x256xf32>
    %cst_17 = arith.constant dense<0.000000e+00> : vector<8x256xf32>
    %31 = tpu.matmul %25, %30, %cst_17 {dimension_numbers = #tpu.dot_dimension_numbers<[1], [0], [0], [1], [0, 0, 1, 1], [], []>} : vector<8x4xf32>, vector<4x256xf32>, vector<8x256xf32> -> vector<8x256xf32>
    %32 = arith.addf %23, %31 : vector<8x256xf32>
    %c3 = arith.constant 3 : index
    %c0_18 = arith.constant 0 : index
    %c0_19 = arith.constant 0 : index
    %33 = vector.load %arg2[%c3, %c0_18, %c0_19] : memref<9x8x4xf32, #tpu.memory_space<vmem>>, vector<1x8x4xf32>
    %34 = vector.shape_cast %33 : vector<1x8x4xf32> to vector<8x4xf32>
    %cst_20 = arith.constant 0.000000e+00 : f32
    %35 = vector.broadcast %cst_20 : f32 to vector<4x1xf32>
    %36 = vector.extract_strided_slice %1 {offsets = [0, 0], sizes = [4, 255], strides = [1, 1]} : vector<4x256xf32> to vector<4x255xf32>
    %37 = tpu.concatenate %35, %36 in 1 : vector<4x1xf32>, vector<4x255xf32> -> vector<4x256xf32>
    %38 = vector.broadcast %3 : vector<1x256xf32> to vector<4x256xf32>
    %39 = arith.mulf %37, %38 : vector<4x256xf32>
    %cst_21 = arith.constant dense<0.000000e+00> : vector<8x256xf32>
    %40 = tpu.matmul %34, %39, %cst_21 {dimension_numbers = #tpu.dot_dimension_numbers<[1], [0], [0], [1], [0, 0, 1, 1], [], []>} : vector<8x4xf32>, vector<4x256xf32>, vector<8x256xf32> -> vector<8x256xf32>
    %41 = arith.addf %32, %40 : vector<8x256xf32>
    %c4 = arith.constant 4 : index
    %c0_22 = arith.constant 0 : index
    %c0_23 = arith.constant 0 : index
    %42 = vector.load %arg2[%c4, %c0_22, %c0_23] : memref<9x8x4xf32, #tpu.memory_space<vmem>>, vector<1x8x4xf32>
    %43 = vector.shape_cast %42 : vector<1x8x4xf32> to vector<8x4xf32>
    %cst_24 = arith.constant dense<0.000000e+00> : vector<8x256xf32>
    %44 = tpu.matmul %43, %1, %cst_24 {dimension_numbers = #tpu.dot_dimension_numbers<[1], [0], [0], [1], [0, 0, 1, 1], [], []>} : vector<8x4xf32>, vector<4x256xf32>, vector<8x256xf32> -> vector<8x256xf32>
    %45 = arith.addf %41, %44 : vector<8x256xf32>
    %c5 = arith.constant 5 : index
    %c0_25 = arith.constant 0 : index
    %c0_26 = arith.constant 0 : index
    %46 = vector.load %arg2[%c5, %c0_25, %c0_26] : memref<9x8x4xf32, #tpu.memory_space<vmem>>, vector<1x8x4xf32>
    %47 = vector.shape_cast %46 : vector<1x8x4xf32> to vector<8x4xf32>
    %48 = vector.extract_strided_slice %1 {offsets = [0, 1], sizes = [4, 255], strides = [1, 1]} : vector<4x256xf32> to vector<4x255xf32>
    %cst_27 = arith.constant 0.000000e+00 : f32
    %49 = vector.broadcast %cst_27 : f32 to vector<4x1xf32>
    %50 = tpu.concatenate %48, %49 in 1 : vector<4x255xf32>, vector<4x1xf32> -> vector<4x256xf32>
    %51 = vector.broadcast %4 : vector<1x256xf32> to vector<4x256xf32>
    %52 = arith.mulf %50, %51 : vector<4x256xf32>
    %cst_28 = arith.constant dense<0.000000e+00> : vector<8x256xf32>
    %53 = tpu.matmul %47, %52, %cst_28 {dimension_numbers = #tpu.dot_dimension_numbers<[1], [0], [0], [1], [0, 0, 1, 1], [], []>} : vector<8x4xf32>, vector<4x256xf32>, vector<8x256xf32> -> vector<8x256xf32>
    %54 = arith.addf %45, %53 : vector<8x256xf32>
    %c6 = arith.constant 6 : index
    %c0_29 = arith.constant 0 : index
    %c0_30 = arith.constant 0 : index
    %55 = vector.load %arg2[%c6, %c0_29, %c0_30] : memref<9x8x4xf32, #tpu.memory_space<vmem>>, vector<1x8x4xf32>
    %56 = vector.shape_cast %55 : vector<1x8x4xf32> to vector<8x4xf32>
    %57 = vector.extract_strided_slice %1 {offsets = [0, 15], sizes = [4, 241], strides = [1, 1]} : vector<4x256xf32> to vector<4x241xf32>
    %cst_31 = arith.constant 0.000000e+00 : f32
    %58 = vector.broadcast %cst_31 : f32 to vector<4x15xf32>
    %59 = tpu.concatenate %57, %58 in 1 : vector<4x241xf32>, vector<4x15xf32> -> vector<4x256xf32>
    %60 = vector.broadcast %3 : vector<1x256xf32> to vector<4x256xf32>
    %61 = arith.mulf %59, %60 : vector<4x256xf32>
    %cst_32 = arith.constant dense<0.000000e+00> : vector<8x256xf32>
    %62 = tpu.matmul %56, %61, %cst_32 {dimension_numbers = #tpu.dot_dimension_numbers<[1], [0], [0], [1], [0, 0, 1, 1], [], []>} : vector<8x4xf32>, vector<4x256xf32>, vector<8x256xf32> -> vector<8x256xf32>
    %63 = arith.addf %54, %62 : vector<8x256xf32>
    %c7 = arith.constant 7 : index
    %c0_33 = arith.constant 0 : index
    %c0_34 = arith.constant 0 : index
    %64 = vector.load %arg2[%c7, %c0_33, %c0_34] : memref<9x8x4xf32, #tpu.memory_space<vmem>>, vector<1x8x4xf32>
    %65 = vector.shape_cast %64 : vector<1x8x4xf32> to vector<8x4xf32>
    %66 = vector.extract_strided_slice %1 {offsets = [0, 16], sizes = [4, 240], strides = [1, 1]} : vector<4x256xf32> to vector<4x240xf32>
    %cst_35 = arith.constant 0.000000e+00 : f32
    %67 = vector.broadcast %cst_35 : f32 to vector<4x16xf32>
    %68 = tpu.concatenate %66, %67 in 1 : vector<4x240xf32>, vector<4x16xf32> -> vector<4x256xf32>
    %cst_36 = arith.constant dense<0.000000e+00> : vector<8x256xf32>
    %69 = tpu.matmul %65, %68, %cst_36 {dimension_numbers = #tpu.dot_dimension_numbers<[1], [0], [0], [1], [0, 0, 1, 1], [], []>} : vector<8x4xf32>, vector<4x256xf32>, vector<8x256xf32> -> vector<8x256xf32>
    %70 = arith.addf %63, %69 : vector<8x256xf32>
    %c8 = arith.constant 8 : index
    %c0_37 = arith.constant 0 : index
    %c0_38 = arith.constant 0 : index
    %71 = vector.load %arg2[%c8, %c0_37, %c0_38] : memref<9x8x4xf32, #tpu.memory_space<vmem>>, vector<1x8x4xf32>
    %72 = vector.shape_cast %71 : vector<1x8x4xf32> to vector<8x4xf32>
    %73 = vector.extract_strided_slice %1 {offsets = [0, 17], sizes = [4, 239], strides = [1, 1]} : vector<4x256xf32> to vector<4x239xf32>
    %cst_39 = arith.constant 0.000000e+00 : f32
    %74 = vector.broadcast %cst_39 : f32 to vector<4x17xf32>
    %75 = tpu.concatenate %73, %74 in 1 : vector<4x239xf32>, vector<4x17xf32> -> vector<4x256xf32>
    %76 = vector.broadcast %4 : vector<1x256xf32> to vector<4x256xf32>
    %77 = arith.mulf %75, %76 : vector<4x256xf32>
    %cst_40 = arith.constant dense<0.000000e+00> : vector<8x256xf32>
    %78 = tpu.matmul %72, %77, %cst_40 {dimension_numbers = #tpu.dot_dimension_numbers<[1], [0], [0], [1], [0, 0, 1, 1], [], []>} : vector<8x4xf32>, vector<4x256xf32>, vector<8x256xf32> -> vector<8x256xf32>
    %79 = arith.addf %70, %78 : vector<8x256xf32>
    %cst_41 = arith.constant 0.000000e+00 : f32
    %80 = vector.broadcast %cst_41 : f32 to vector<8x256xf32>
    %81 = arith.maximumf %79, %80 : vector<8x256xf32>
    %82 = vector.extract_strided_slice %81 {offsets = [0, 1], sizes = [8, 255], strides = [1, 1]} : vector<8x256xf32> to vector<8x255xf32>
    %cst_42 = arith.constant 0.000000e+00 : f32
    %83 = vector.broadcast %cst_42 : f32 to vector<8x1xf32>
    %84 = tpu.concatenate %82, %83 in 1 : vector<8x255xf32>, vector<8x1xf32> -> vector<8x256xf32>
    %85 = vector.broadcast %4 : vector<1x256xf32> to vector<8x256xf32>
    %86 = arith.mulf %84, %85 : vector<8x256xf32>
    %87 = vector.extract_strided_slice %81 {offsets = [0, 16], sizes = [8, 240], strides = [1, 1]} : vector<8x256xf32> to vector<8x240xf32>
    %cst_43 = arith.constant 0.000000e+00 : f32
    %88 = vector.broadcast %cst_43 : f32 to vector<8x16xf32>
    %89 = tpu.concatenate %87, %88 in 1 : vector<8x240xf32>, vector<8x16xf32> -> vector<8x256xf32>
    %90 = vector.extract_strided_slice %81 {offsets = [0, 17], sizes = [8, 239], strides = [1, 1]} : vector<8x256xf32> to vector<8x239xf32>
    %cst_44 = arith.constant 0.000000e+00 : f32
    %91 = vector.broadcast %cst_44 : f32 to vector<8x17xf32>
    %92 = tpu.concatenate %90, %91 in 1 : vector<8x239xf32>, vector<8x17xf32> -> vector<8x256xf32>
    %93 = vector.broadcast %4 : vector<1x256xf32> to vector<8x256xf32>
    %94 = arith.mulf %92, %93 : vector<8x256xf32>
    %c0_45 = arith.constant 0 : index
    %c0_46 = arith.constant 0 : index
    %95 = vector.load %arg5[%c0_45, %c0_46] : memref<4x1xf32, #tpu.memory_space<vmem>>, vector<4x1xf32>
    %c4_47 = arith.constant 4 : index
    %c0_48 = arith.constant 0 : index
    %c0_49 = arith.constant 0 : index
    %96 = vector.load %arg4[%c4_47, %c0_48, %c0_49] : memref<9x4x8xf32, #tpu.memory_space<vmem>>, vector<1x4x8xf32>
    %97 = vector.shape_cast %96 : vector<1x4x8xf32> to vector<4x8xf32>
    %cst_50 = arith.constant dense<0.000000e+00> : vector<4x256xf32>
    %98 = tpu.matmul %97, %81, %cst_50 {dimension_numbers = #tpu.dot_dimension_numbers<[1], [0], [0], [1], [0, 0, 1, 1], [], []>} : vector<4x8xf32>, vector<8x256xf32>, vector<4x256xf32> -> vector<4x256xf32>
    %99 = vector.broadcast %95 : vector<4x1xf32> to vector<4x256xf32>
    %100 = arith.addf %98, %99 : vector<4x256xf32>
    %c3_51 = arith.constant 3 : index
    %c0_52 = arith.constant 0 : index
    %c0_53 = arith.constant 0 : index
    %101 = vector.load %arg4[%c3_51, %c0_52, %c0_53] : memref<9x4x8xf32, #tpu.memory_space<vmem>>, vector<1x4x8xf32>
    %102 = vector.shape_cast %101 : vector<1x4x8xf32> to vector<4x8xf32>
    %cst_54 = arith.constant dense<0.000000e+00> : vector<4x256xf32>
    %103 = tpu.matmul %102, %86, %cst_54 {dimension_numbers = #tpu.dot_dimension_numbers<[1], [0], [0], [1], [0, 0, 1, 1], [], []>} : vector<4x8xf32>, vector<8x256xf32>, vector<4x256xf32> -> vector<4x256xf32>
    %c5_55 = arith.constant 5 : index
    %c0_56 = arith.constant 0 : index
    %c0_57 = arith.constant 0 : index
    %104 = vector.load %arg4[%c5_55, %c0_56, %c0_57] : memref<9x4x8xf32, #tpu.memory_space<vmem>>, vector<1x4x8xf32>
    %105 = vector.shape_cast %104 : vector<1x4x8xf32> to vector<4x8xf32>
    %cst_58 = arith.constant dense<0.000000e+00> : vector<4x256xf32>
    %106 = tpu.matmul %105, %81, %cst_58 {dimension_numbers = #tpu.dot_dimension_numbers<[1], [0], [0], [1], [0, 0, 1, 1], [], []>} : vector<4x8xf32>, vector<8x256xf32>, vector<4x256xf32> -> vector<4x256xf32>
    %107 = arith.addf %103, %106 : vector<4x256xf32>
    %108 = vector.broadcast %95 : vector<4x1xf32> to vector<4x256xf32>
    %109 = arith.addf %107, %108 : vector<4x256xf32>
    %c1_59 = arith.constant 1 : index
    %c0_60 = arith.constant 0 : index
    %c0_61 = arith.constant 0 : index
    %110 = vector.load %arg4[%c1_59, %c0_60, %c0_61] : memref<9x4x8xf32, #tpu.memory_space<vmem>>, vector<1x4x8xf32>
    %111 = vector.shape_cast %110 : vector<1x4x8xf32> to vector<4x8xf32>
    %cst_62 = arith.constant dense<0.000000e+00> : vector<4x256xf32>
    %112 = tpu.matmul %111, %89, %cst_62 {dimension_numbers = #tpu.dot_dimension_numbers<[1], [0], [0], [1], [0, 0, 1, 1], [], []>} : vector<4x8xf32>, vector<8x256xf32>, vector<4x256xf32> -> vector<4x256xf32>
    %c7_63 = arith.constant 7 : index
    %c0_64 = arith.constant 0 : index
    %c0_65 = arith.constant 0 : index
    %113 = vector.load %arg4[%c7_63, %c0_64, %c0_65] : memref<9x4x8xf32, #tpu.memory_space<vmem>>, vector<1x4x8xf32>
    %114 = vector.shape_cast %113 : vector<1x4x8xf32> to vector<4x8xf32>
    %cst_66 = arith.constant dense<0.000000e+00> : vector<4x256xf32>
    %115 = tpu.matmul %114, %81, %cst_66 {dimension_numbers = #tpu.dot_dimension_numbers<[1], [0], [0], [1], [0, 0, 1, 1], [], []>} : vector<4x8xf32>, vector<8x256xf32>, vector<4x256xf32> -> vector<4x256xf32>
    %116 = arith.addf %112, %115 : vector<4x256xf32>
    %117 = vector.broadcast %95 : vector<4x1xf32> to vector<4x256xf32>
    %118 = arith.addf %116, %117 : vector<4x256xf32>
    %c0_67 = arith.constant 0 : index
    %c0_68 = arith.constant 0 : index
    %c0_69 = arith.constant 0 : index
    %119 = vector.load %arg4[%c0_67, %c0_68, %c0_69] : memref<9x4x8xf32, #tpu.memory_space<vmem>>, vector<1x4x8xf32>
    %120 = vector.shape_cast %119 : vector<1x4x8xf32> to vector<4x8xf32>
    %cst_70 = arith.constant dense<0.000000e+00> : vector<4x256xf32>
    %121 = tpu.matmul %120, %94, %cst_70 {dimension_numbers = #tpu.dot_dimension_numbers<[1], [0], [0], [1], [0, 0, 1, 1], [], []>} : vector<4x8xf32>, vector<8x256xf32>, vector<4x256xf32> -> vector<4x256xf32>
    %c2_71 = arith.constant 2 : index
    %c0_72 = arith.constant 0 : index
    %c0_73 = arith.constant 0 : index
    %122 = vector.load %arg4[%c2_71, %c0_72, %c0_73] : memref<9x4x8xf32, #tpu.memory_space<vmem>>, vector<1x4x8xf32>
    %123 = vector.shape_cast %122 : vector<1x4x8xf32> to vector<4x8xf32>
    %cst_74 = arith.constant dense<0.000000e+00> : vector<4x256xf32>
    %124 = tpu.matmul %123, %89, %cst_74 {dimension_numbers = #tpu.dot_dimension_numbers<[1], [0], [0], [1], [0, 0, 1, 1], [], []>} : vector<4x8xf32>, vector<8x256xf32>, vector<4x256xf32> -> vector<4x256xf32>
    %125 = arith.addf %121, %124 : vector<4x256xf32>
    %c6_75 = arith.constant 6 : index
    %c0_76 = arith.constant 0 : index
    %c0_77 = arith.constant 0 : index
    %126 = vector.load %arg4[%c6_75, %c0_76, %c0_77] : memref<9x4x8xf32, #tpu.memory_space<vmem>>, vector<1x4x8xf32>
    %127 = vector.shape_cast %126 : vector<1x4x8xf32> to vector<4x8xf32>
    %cst_78 = arith.constant dense<0.000000e+00> : vector<4x256xf32>
    %128 = tpu.matmul %127, %86, %cst_78 {dimension_numbers = #tpu.dot_dimension_numbers<[1], [0], [0], [1], [0, 0, 1, 1], [], []>} : vector<4x8xf32>, vector<8x256xf32>, vector<4x256xf32> -> vector<4x256xf32>
    %129 = arith.addf %125, %128 : vector<4x256xf32>
    %c8_79 = arith.constant 8 : index
    %c0_80 = arith.constant 0 : index
    %c0_81 = arith.constant 0 : index
    %130 = vector.load %arg4[%c8_79, %c0_80, %c0_81] : memref<9x4x8xf32, #tpu.memory_space<vmem>>, vector<1x4x8xf32>
    %131 = vector.shape_cast %130 : vector<1x4x8xf32> to vector<4x8xf32>
    %cst_82 = arith.constant dense<0.000000e+00> : vector<4x256xf32>
    %132 = tpu.matmul %131, %81, %cst_82 {dimension_numbers = #tpu.dot_dimension_numbers<[1], [0], [0], [1], [0, 0, 1, 1], [], []>} : vector<4x8xf32>, vector<8x256xf32>, vector<4x256xf32> -> vector<4x256xf32>
    %133 = arith.addf %129, %132 : vector<4x256xf32>
    %134 = vector.broadcast %95 : vector<4x1xf32> to vector<4x256xf32>
    %135 = arith.addf %133, %134 : vector<4x256xf32>
    %cst_83 = arith.constant 0.000000e+00 : f32
    %136 = vector.broadcast %cst_83 : f32 to vector<4x256xf32>
    %137 = arith.maximumf %100, %136 : vector<4x256xf32>
    %c0_84 = arith.constant 0 : index
    %c0_85 = arith.constant 0 : index
    %c0_86 = arith.constant 0 : index
    %c0_87 = arith.constant 0 : index
    %138 = vector.load %arg7[%c0_84, %c0_85, %c0_86, %c0_87] : memref<1x4x4x256xf32, #tpu.memory_space<vmem>>, vector<1x1x4x256xf32>
    %139 = vector.shape_cast %138 : vector<1x1x4x256xf32> to vector<4x256xf32>
    %140 = vector.shape_cast %137 : vector<4x256xf32> to vector<1x1x4x256xf32>
    tpu.vector_store %arg7[%c0_84, %c0_85, %c0_86, %c0_87], %140 {strides = array<i32>} : memref<1x4x4x256xf32, #tpu.memory_space<vmem>>, vector<1x1x4x256xf32>,
    %cst_88 = arith.constant 0.000000e+00 : f32
    %141 = vector.broadcast %cst_88 : f32 to vector<4x256xf32>
    %142 = arith.maximumf %109, %141 : vector<4x256xf32>
    %c0_89 = arith.constant 0 : index
    %c1_90 = arith.constant 1 : index
    %c0_91 = arith.constant 0 : index
    %c0_92 = arith.constant 0 : index
    %143 = vector.load %arg7[%c0_89, %c1_90, %c0_91, %c0_92] : memref<1x4x4x256xf32, #tpu.memory_space<vmem>>, vector<1x1x4x256xf32>
    %144 = vector.shape_cast %143 : vector<1x1x4x256xf32> to vector<4x256xf32>
    %145 = vector.shape_cast %142 : vector<4x256xf32> to vector<1x1x4x256xf32>
    tpu.vector_store %arg7[%c0_89, %c1_90, %c0_91, %c0_92], %145 {strides = array<i32>} : memref<1x4x4x256xf32, #tpu.memory_space<vmem>>, vector<1x1x4x256xf32>,
    %cst_93 = arith.constant 0.000000e+00 : f32
    %146 = vector.broadcast %cst_93 : f32 to vector<4x256xf32>
    %147 = arith.maximumf %118, %146 : vector<4x256xf32>
    %c0_94 = arith.constant 0 : index
    %c2_95 = arith.constant 2 : index
    %c0_96 = arith.constant 0 : index
    %c0_97 = arith.constant 0 : index
    %148 = vector.load %arg7[%c0_94, %c2_95, %c0_96, %c0_97] : memref<1x4x4x256xf32, #tpu.memory_space<vmem>>, vector<1x1x4x256xf32>
    %149 = vector.shape_cast %148 : vector<1x1x4x256xf32> to vector<4x256xf32>
    %150 = vector.shape_cast %147 : vector<4x256xf32> to vector<1x1x4x256xf32>
    tpu.vector_store %arg7[%c0_94, %c2_95, %c0_96, %c0_97], %150 {strides = array<i32>} : memref<1x4x4x256xf32, #tpu.memory_space<vmem>>, vector<1x1x4x256xf32>,
    %cst_98 = arith.constant 0.000000e+00 : f32
    %151 = vector.broadcast %cst_98 : f32 to vector<4x256xf32>
    %152 = arith.maximumf %135, %151 : vector<4x256xf32>
    %c0_99 = arith.constant 0 : index
    %c3_100 = arith.constant 3 : index
    %c0_101 = arith.constant 0 : index
    %c0_102 = arith.constant 0 : index
    %153 = vector.load %arg7[%c0_99, %c3_100, %c0_101, %c0_102] : memref<1x4x4x256xf32, #tpu.memory_space<vmem>>, vector<1x1x4x256xf32>
    %154 = vector.shape_cast %153 : vector<1x1x4x256xf32> to vector<4x256xf32>
    %155 = vector.shape_cast %152 : vector<4x256xf32> to vector<1x1x4x256xf32>
    tpu.vector_store %arg7[%c0_99, %c3_100, %c0_101, %c0_102], %155 {strides = array<i32>} : memref<1x4x4x256xf32, #tpu.memory_space<vmem>>, vector<1x1x4x256xf32>,
    return
  }
  func.func @transform_0(%arg0: i32) -> (i32, i32, i32) {
    %c0_i32 = arith.constant 0 : i32
    %c0_i32_0 = arith.constant 0 : i32
    %c0_i32_1 = arith.constant 0 : i32
    return %arg0, %c0_i32, %c0_i32_0 : i32, i32, i32
  }
  func.func @transform_1(%arg0: i32) -> (i32, i32, i32) {
    %c0_i32 = arith.constant 0 : i32
    %c0_i32_0 = arith.constant 0 : i32
    %c0_i32_1 = arith.constant 0 : i32
    %c0_i32_2 = arith.constant 0 : i32
    return %c0_i32, %c0_i32_0, %c0_i32_1 : i32, i32, i32
  }
  func.func @transform_2(%arg0: i32) -> (i32, i32) {
    %c0_i32 = arith.constant 0 : i32
    %c0_i32_0 = arith.constant 0 : i32
    %c0_i32_1 = arith.constant 0 : i32
    return %c0_i32, %c0_i32_0 : i32, i32
  }
  func.func @transform_3(%arg0: i32) -> (i32, i32, i32) {
    %c0_i32 = arith.constant 0 : i32
    %c0_i32_0 = arith.constant 0 : i32
    %c0_i32_1 = arith.constant 0 : i32
    %c0_i32_2 = arith.constant 0 : i32
    return %c0_i32, %c0_i32_0, %c0_i32_1 : i32, i32, i32
  }
  func.func @transform_4(%arg0: i32) -> (i32, i32) {
    %c0_i32 = arith.constant 0 : i32
    %c0_i32_0 = arith.constant 0 : i32
    %c0_i32_1 = arith.constant 0 : i32
    return %c0_i32, %c0_i32_0 : i32, i32
  }
  func.func @transform_5(%arg0: i32) -> (i32, i32) {
    %c0_i32 = arith.constant 0 : i32
    %c0_i32_0 = arith.constant 0 : i32
    %c0_i32_1 = arith.constant 0 : i32
    return %c0_i32, %c0_i32_0 : i32, i32
  }
  func.func @transform_6(%arg0: i32) -> (i32, i32, i32, i32) {
    %c0_i32 = arith.constant 0 : i32
    %c0_i32_0 = arith.constant 0 : i32
    %c0_i32_1 = arith.constant 0 : i32
    %c0_i32_2 = arith.constant 0 : i32
    return %arg0, %c0_i32, %c0_i32_0, %c0_i32_1 : i32, i32, i32, i32
  }
}

</mosaic_0001>

<llo_original>
// kernel: decoder_block_forward.1
$region0: #{decoder_block_forward.1}
  #allocation0 [shape = 'u32[]', space=smem, size = 0x4, offset = 0x4, fixed_abs, tag = 'smem constant byte address 0x4 - core index']
  #allocation1 [shape = 'u32[72,128]{1,0:T(1,128)}', space=vmem, size = 0x9000, scoped, tag = 'internal scratch']
  %s0 = inlined_call_operand.vmem [shape: f32[2,4,256], index: 0, kind: input, shape index: {}]
  %s1 = inlined_call_operand.vmem [shape: f32[9,8,4], index: 1, kind: input, shape index: {}]
  %s2 = inlined_call_operand.vmem [shape: f32[8,1], index: 2, kind: input, shape index: {}]
  %s3 = inlined_call_operand.vmem [shape: f32[9,4,8], index: 3, kind: input, shape index: {}]
  %s4 = inlined_call_operand.vmem [shape: f32[4,1], index: 4, kind: input, shape index: {}]
  %s5 = inlined_call_operand.vmem [shape: f32[2,256], index: 5, kind: input, shape index: {}]
  %s6 = inlined_call_operand.vmem [shape: f32[2,4,4,256], index: 6, kind: output, shape index: {}]
  %s7 = sld [smem:[#allocation0]]
  $region57: #{decoder_block_forward.1} parent=0
    _
  %s9 = ssub.s32 1, %s7
  %s10 = scalar_select 0, %s9, %s7
  loop: start=0, step=1, limit=4
  $region2: #{decoder_block_forward.1} parent=0 // loop_pre_header
    _
  $region3: #{decoder_block_forward.1} parent=0 // loop_header
    %s12 = sphi 0, %s16
    %p13 = scmp.ge.s32.totalorder %s12, 4
    %s22 = sphi 0, %s24
    %s25 = sphi 0, %s22
    %s26 = sphi 0, %s25
    %s42 = sphi 0, %s26
    %s46 = sphi 0, %s46
    %s48 = sphi 0, %s46
    %s49 = sphi 0, %s48
    %s63 = sphi 0, %s49
    %s67 = sphi 0, %s67
    %s69 = sphi 0, %s67
    %s70 = sphi 0, %s69
    %s84 = sphi 0, %s70
    %s88 = sphi 0, %s88
    %s90 = sphi 0, %s88
    %s91 = sphi 0, %s90
    %s105 = sphi 0, %s91
    %s109 = sphi 0, %s109
    %s111 = sphi 0, %s109
    %s112 = sphi 0, %s111
    %s126 = sphi 0, %s112
    %s130 = sphi 0, %s130
    %s132 = sphi 0, %s130
    %s133 = sphi 0, %s132
    %s147 = sphi 0, %s133
    %s153 = sphi 0, %s155
    %s156 = sphi 0, %s153
    %s157 = sphi 0, %s156
    %s173 = sphi 0, %s157
  $region4: #{decoder_block_forward.1} parent=0 // loop_header_branch
    %15 = sbr.rel (%p13) target = $region8
  $region5: #{decoder_block_forward.1} parent=0 // loop_body
    %s17 = ssub.s32 %s12, 1
    %s18 = ssub.s32 %s12, 2
    %s19 = sadd.s32 %s12, 1
    %s20 = ssub.s32 %s12, %s19
    %p21 = scmp.eq.s32.totalorder %s20, 0
    %s23 = sadd.s32 %s22, 1
    %s24 = scalar_select %p21, %s22, %s23
    %p27 = pneg %p21
    %p28 = scmp.eq.s32.totalorder %s12, 1
    %p29 = por %p27, %p28
    %p30 = scmp.ne.s32.totalorder %s22, %s25
    %p31 = scmp.eq.s32.totalorder %s12, 0
    %p32 = por %p30, %p31
    %p33 = scmp.ne.s32.totalorder %s22, %s25
    %p34 = scmp.eq.s32.totalorder %s17, 1
    %p35 = por %p33, %p34
    %p36 = scmp.ne.s32.totalorder %s25, %s26
    %p37 = scmp.eq.s32.totalorder %s17, 0
    %p38 = por %p36, %p37
    %p39 = scmp.ne.s32.totalorder %s25, %s26
    %p40 = scmp.eq.s32.totalorder %s18, 1
    %p41 = por %p39, %p40
    %p43 = scmp.ne.s32.totalorder %s26, %s42
    %p44 = scmp.eq.s32.totalorder %s18, 0
    %p45 = por %p43, %p44
    %s47 = sadd.s32 %s46, 1
    %p50 = scmp.eq.s32.totalorder %s12, 1
    %p51 = scmp.ne.s32.totalorder %s46, %s48
    %p52 = scmp.eq.s32.totalorder %s12, 0
    %p53 = por %p51, %p52
    %p54 = scmp.ne.s32.totalorder %s46, %s48
    %p55 = scmp.eq.s32.totalorder %s17, 1
    %p56 = por %p54, %p55
    %p57 = scmp.ne.s32.totalorder %s48, %s49
    %p58 = scmp.eq.s32.totalorder %s17, 0
    %p59 = por %p57, %p58
    %p60 = scmp.ne.s32.totalorder %s48, %s49
    %p61 = scmp.eq.s32.totalorder %s18, 1
    %p62 = por %p60, %p61
    %p64 = scmp.ne.s32.totalorder %s49, %s63
    %p65 = scmp.eq.s32.totalorder %s18, 0
    %p66 = por %p64, %p65
    %s68 = sadd.s32 %s67, 1
    %p71 = scmp.eq.s32.totalorder %s12, 1
    %p72 = scmp.ne.s32.totalorder %s67, %s69
    %p73 = scmp.eq.s32.totalorder %s12, 0
    %p74 = por %p72, %p73
    %p75 = scmp.ne.s32.totalorder %s67, %s69
    %p76 = scmp.eq.s32.totalorder %s17, 1
    %p77 = por %p75, %p76
    %p78 = scmp.ne.s32.totalorder %s69, %s70
    %p79 = scmp.eq.s32.totalorder %s17, 0
    %p80 = por %p78, %p79
    %p81 = scmp.ne.s32.totalorder %s69, %s70
    %p82 = scmp.eq.s32.totalorder %s18, 1
    %p83 = por %p81, %p82
    %p85 = scmp.ne.s32.totalorder %s70, %s84
    %p86 = scmp.eq.s32.totalorder %s18, 0
    %p87 = por %p85, %p86
    %s89 = sadd.s32 %s88, 1
    %p92 = scmp.eq.s32.totalorder %s12, 1
    %p93 = scmp.ne.s32.totalorder %s88, %s90
    %p94 = scmp.eq.s32.totalorder %s12, 0
    %p95 = por %p93, %p94
    %p96 = scmp.ne.s32.totalorder %s88, %s90
    %p97 = scmp.eq.s32.totalorder %s17, 1
    %p98 = por %p96, %p97
    %p99 = scmp.ne.s32.totalorder %s90, %s91
    %p100 = scmp.eq.s32.totalorder %s17, 0
    %p101 = por %p99, %p100
    %p102 = scmp.ne.s32.totalorder %s90, %s91
    %p103 = scmp.eq.s32.totalorder %s18, 1
    %p104 = por %p102, %p103
    %p106 = scmp.ne.s32.totalorder %s91, %s105
    %p107 = scmp.eq.s32.totalorder %s18, 0
    %p108 = por %p106, %p107
    %s110 = sadd.s32 %s109, 1
    %p113 = scmp.eq.s32.totalorder %s12, 1
    %p114 = scmp.ne.s32.totalorder %s109, %s111
    %p115 = scmp.eq.s32.totalorder %s12, 0
    %p116 = por %p114, %p115
    %p117 = scmp.ne.s32.totalorder %s109, %s111
    %p118 = scmp.eq.s32.totalorder %s17, 1
    %p119 = por %p117, %p118
    %p120 = scmp.ne.s32.totalorder %s111, %s112
    %p121 = scmp.eq.s32.totalorder %s17, 0
    %p122 = por %p120, %p121
    %p123 = scmp.ne.s32.totalorder %s111, %s112
    %p124 = scmp.eq.s32.totalorder %s18, 1
    %p125 = por %p123, %p124
    %p127 = scmp.ne.s32.totalorder %s112, %s126
    %p128 = scmp.eq.s32.totalorder %s18, 0
    %p129 = por %p127, %p128
    %s131 = sadd.s32 %s130, 1
    %p134 = scmp.eq.s32.totalorder %s12, 1
    %p135 = scmp.ne.s32.totalorder %s130, %s132
    %p136 = scmp.eq.s32.totalorder %s12, 0
    %p137 = por %p135, %p136
    %p138 = scmp.ne.s32.totalorder %s130, %s132
    %p139 = scmp.eq.s32.totalorder %s17, 1
    %p140 = por %p138, %p139
    %p141 = scmp.ne.s32.totalorder %s132, %s133
    %p142 = scmp.eq.s32.totalorder %s17, 0
    %p143 = por %p141, %p142
    %p144 = scmp.ne.s32.totalorder %s132, %s133
    %p145 = scmp.eq.s32.totalorder %s18, 1
    %p146 = por %p144, %p145
    %p148 = scmp.ne.s32.totalorder %s133, %s147
    %p149 = scmp.eq.s32.totalorder %s18, 0
    %p150 = por %p148, %p149
    %s151 = ssub.s32 %s12, %s19
    %p152 = scmp.eq.s32.totalorder %s151, 0
    %s154 = sadd.s32 %s153, 1
    %s155 = scalar_select %p152, %s153, %s154
    %p158 = pneg %p152
    %p159 = scmp.eq.s32.totalorder %s12, 1
    %p160 = por %p158, %p159
    %p161 = scmp.ne.s32.totalorder %s153, %s156
    %p162 = scmp.eq.s32.totalorder %s12, 0
    %p163 = por %p161, %p162
    %p164 = scmp.ne.s32.totalorder %s153, %s156
    %p165 = scmp.eq.s32.totalorder %s17, 1
    %p166 = por %p164, %p165
    %p167 = scmp.ne.s32.totalorder %s156, %s157
    %p168 = scmp.eq.s32.totalorder %s17, 0
    %p169 = por %p167, %p168
    %p170 = scmp.ne.s32.totalorder %s156, %s157
    %p171 = scmp.eq.s32.totalorder %s18, 1
    %p172 = por %p170, %p171
    %p174 = scmp.ne.s32.totalorder %s157, %s173
    %p175 = scmp.eq.s32.totalorder %s18, 0
    %p176 = por %p174, %p175
    %p177 = scmp.le.s32.totalorder 1, %s12
    %p178 = scmp.lt.s32.totalorder %s12, 3
    %p179 = pnand %p177, %p178
    %p180 = pneg %p179
    // Predicated region
    $region9: #{decoder_block_forward.1} parent=5 // pred_check
      _
    $region10: #{decoder_block_forward.1} parent=5 // pred_check_branch
      %182 = sbr.rel (%p179) target = $region12
    $region11: #{decoder_block_forward.1} parent=5 // pred_region
      %s183 = ssub.s32 %s12, 1
      // Predicated region
      $region13: #{decoder_block_forward.1} parent=11 // pred_check
        %p184 = pneg %p59
      $region14: #{decoder_block_forward.1} parent=11 // pred_check_branch
        %186 = sbr.rel (%p184) target = $region16
      $region15: #{decoder_block_forward.1} parent=11 // pred_region
        _
      $region16: #{decoder_block_forward.1} parent=11 // pred_fallthru
        _
      // Predicated region
      $region17: #{decoder_block_forward.1} parent=11 // pred_check
        %p187 = pneg %p80
      $region18: #{decoder_block_forward.1} parent=11 // pred_check_branch
        %189 = sbr.rel (%p187) target = $region20
      $region19: #{decoder_block_forward.1} parent=11 // pred_region
        _
      $region20: #{decoder_block_forward.1} parent=11 // pred_fallthru
        _
      // Predicated region
      $region21: #{decoder_block_forward.1} parent=11 // pred_check
        %p190 = pneg %p101
      $region22: #{decoder_block_forward.1} parent=11 // pred_check_branch
        %192 = sbr.rel (%p190) target = $region24
      $region23: #{decoder_block_forward.1} parent=11 // pred_region
        _
      $region24: #{decoder_block_forward.1} parent=11 // pred_fallthru
        _
      // Predicated region
      $region25: #{decoder_block_forward.1} parent=11 // pred_check
        %p193 = pneg %p122
      $region26: #{decoder_block_forward.1} parent=11 // pred_check_branch
        %195 = sbr.rel (%p193) target = $region28
      $region27: #{decoder_block_forward.1} parent=11 // pred_region
        _
      $region28: #{decoder_block_forward.1} parent=11 // pred_fallthru
        _
      // Predicated region
      $region29: #{decoder_block_forward.1} parent=11 // pred_check
        %p196 = pneg %p143
      $region30: #{decoder_block_forward.1} parent=11 // pred_check_branch
        %198 = sbr.rel (%p196) target = $region32
      $region31: #{decoder_block_forward.1} parent=11 // pred_region
        _
      $region32: #{decoder_block_forward.1} parent=11 // pred_fallthru
        _
    $region12: #{decoder_block_forward.1} parent=5 // pred_fallthru
      _
    %p199 = scmp.lt.s32.totalorder %s12, 2
    // Predicated region
    $region33: #{decoder_block_forward.1} parent=5 // pred_check
      %p200 = pneg %p199
    $region34: #{decoder_block_forward.1} parent=5 // pred_check_branch
      %202 = sbr.rel (%p200) target = $region36
    $region35: #{decoder_block_forward.1} parent=5 // pred_region
      // Predicated region
      $region37: #{decoder_block_forward.1} parent=35 // pred_check
        %p203 = pneg %p32
      $region38: #{decoder_block_forward.1} parent=35 // pred_check_branch
        %205 = sbr.rel (%p203) target = $region40
      $region39: #{decoder_block_forward.1} parent=35 // pred_region
        %p206 = scmp.lt.s32.totalorder %s12, 1
        %s207 = scalar_select %p206, %s12, 1
        %s208 = smul.addr %s207, 2
        %s209 = smul.addr %s208, 4
        %s210 = scalar_lea.vmem %s0, %s209
      $region40: #{decoder_block_forward.1} parent=35 // pred_fallthru
        _
    $region36: #{decoder_block_forward.1} parent=5 // pred_fallthru
      _
    %p211 = scmp.le.s32.totalorder 1, %s12
    %p212 = scmp.lt.s32.totalorder %s12, 3
    %p213 = pnand %p211, %p212
    %p214 = pneg %p213
    // Predicated region
    $region41: #{decoder_block_forward.1} parent=5 // pred_check
      _
    $region42: #{decoder_block_forward.1} parent=5 // pred_check_branch
      %216 = sbr.rel (%p213) target = $region44
    $region43: #{decoder_block_forward.1} parent=5 // pred_region
      %s217 = ssub.s32 %s12, 1
      %p218 = scmp.lt.s32.totalorder %s17, 1
      %s219 = scalar_select %p218, %s17, 1
      %s220 = smul.addr %s219, 2
      %s221 = smul.addr %s220, 4
      %s222 = scalar_lea.vmem %s0, %s221
      %p223 = pneg %p38
      %p224 = pneg %p35
      %p225 = pneg %p59
      %p226 = pneg %p56
      %p227 = pneg %p80
      %p228 = pneg %p77
      %p229 = pneg %p101
      %p230 = pneg %p98
      %p231 = pneg %p122
      %p232 = pneg %p119
      %p233 = pneg %p143
      %p234 = pneg %p140
      %p235 = pneg %p169
      %p236 = pneg %p166
      %p237 = scmp.lt.s32.totalorder %s17, 1
      %s238 = scalar_select %p237, %s17, 1
      %s239 = smul.addr %s238, 8
      %s240 = smul.addr %s239, 4
      %s241 = scalar_lea.vmem %s6, %s240
      %p242 = scmp.lt.s32.totalorder %s17, 1
      %s243 = scalar_select %p242, %s17, 1
      %s244 = smul.addr %s243, 2
      %s245 = smul.addr %s244, 4
      %s246 = scalar_lea.vmem %s0, %s245
      %p247 = scmp.lt.s32.totalorder %s17, 1
      %s248 = scalar_select %p247, %s17, 1
      %s249 = smul.addr %s248, 8
      %s250 = smul.addr %s249, 4
      %s251 = scalar_lea.vmem %s6, %s250
      %v252 = vld [vmem:[%s246] sm:$0xff]
      %v253 = vld [vmem:[%s5] sm:$0xf]
      %v254 = vld [vmem:[%s2] sm:$0xff]
      %256 = vset.pattern.permute.xlu0 0
      %257 = vperm.xlu0 %256, %v254
      %v258 = vpop.permute.xlu0 %257
      %v260 = vld [vmem:[%s1] sm:$0xff]
      %262 = vst [vmem:[#allocation1] ss:$2 sm:$0xff] %v252
      %v263 = vld.sshfl [vmem:[#allocation1] sm:$0xff pattern:$0x75316420]
      %v264 = vld.sshfl [vmem:[#allocation1 + $0x8] sm:$0xff pattern:$0x75316420]
      %265 = vrot.lane.b32.xlu0 %v263, 17
      %v266 = vpop.permute.xlu0 %265
      %267 = vrot.lane.b32.xlu0 %v264, 17
      %v268 = vpop.permute.xlu0 %267
      %vm269 = vcmask 138240
      %v270 = vsel %vm269, %v266, %v268
      %v273 = vsel %vm269, 0.0, %v266
      %v275 = vperm.slane %v253, 0
      %v276 = vperm.slane %v253, 2
      %v279 = vperm.slane %v275, 0
      %v280 = vperm.slane %v276, 0
      %v281 = vmul.f32 %v273, %v279
      %v282 = vmul.f32 %v270, %v280
      %vm283 = vcmask 31744
      %v285 = vsel %vm283, %v260, 0
      %vm287 = vcmask 1043456
      %v289 = vsel %vm287, %v281, 0
      %v292 = vsel %vm287, %v282, 0
      %294 = vmatpush.msra.mxu0 0.0
      %295 = vmatpush.msra.mxu0 0.0
      %296 = vmatpush.msra.mxu0 0.0
      %297 = vmatpush.msra.mxu0 0.0
      %298 = vmatpush.msra.mxu0 0.0
      %299 = vmatpush.msra.mxu0 0.0
      %300 = vmatpush.msra.mxu0 0.0
      %301 = vmatpush.msra.mxu0 0.0
      %302 = vmatpush.msra.mxu0 0.0
      %303 = vmatpush.msra.mxu0 0.0
      %304 = vmatpush.msra.mxu0 0.0
      %305 = vmatpush.msra.mxu0 0.0
      %306 = vmatpush.msra.mxu0 0.0
      %307 = vmatpush.msra.mxu0 0.0
      %308 = vmatpush.msra.mxu0 0.0
      %309 = vmatpush.msra.mxu0 %v289
      %310 = vmatmul.f32.gmra.mxu0 %v285
      %v311 = vpop.f32.mrf.mxu0
      %v312 = vadd.f32 0.0, %v311
      %313 = vdwg.mxu0
      %314 = vmatpush.msra.mxu0 0.0
      %315 = vmatpush.msra.mxu0 0.0
      %316 = vmatpush.msra.mxu0 0.0
      %317 = vmatpush.msra.mxu0 0.0
      %318 = vmatpush.msra.mxu0 0.0
      %319 = vmatpush.msra.mxu0 0.0
      %320 = vmatpush.msra.mxu0 0.0
      %321 = vmatpush.msra.mxu0 0.0
      %322 = vmatpush.msra.mxu0 0.0
      %323 = vmatpush.msra.mxu0 0.0
      %324 = vmatpush.msra.mxu0 0.0
      %325 = vmatpush.msra.mxu0 0.0
      %326 = vmatpush.msra.mxu0 0.0
      %327 = vmatpush.msra.mxu0 0.0
      %328 = vmatpush.msra.mxu0 0.0
      %329 = vmatpush.msra.mxu0 %v292
      %330 = vmatmul.f32.gmra.mxu0 %v285
      %v331 = vpop.f32.mrf.mxu0
      %v332 = vadd.f32 0.0, %v331
      %333 = vdwg.mxu0
      %v334 = vadd.f32 %v258, %v312
      %v335 = vadd.f32 %v258, %v332
      %s336 = scalar_lea.vmem %s1, 8
      %v337 = vld [vmem:[%s336] sm:$0xff]
      %338 = vst [vmem:[#allocation1] ss:$2 sm:$0xff] %v252
      %v339 = vld.sshfl [vmem:[#allocation1] sm:$0xff pattern:$0x75316420]
      %v340 = vld.sshfl [vmem:[#allocation1 + $0x8] sm:$0xff pattern:$0x75316420]
      %341 = vrot.lane.b32.xlu0 %v339, 16
      %v342 = vpop.permute.xlu0 %341
      %343 = vrot.lane.b32.xlu0 %v340, 16
      %v344 = vpop.permute.xlu0 %343
      %vm345 = vcmask 130048
      %v346 = vsel %vm345, %v342, %v344
      %v348 = vsel %vm345, 0.0, %v342
      %v350 = vsel %vm283, %v337, 0
      %v353 = vsel %vm287, %v348, 0
      %v355 = vsel %vm287, %v346, 0
      %357 = vmatpush.msra.mxu0 0.0
      %358 = vmatpush.msra.mxu0 0.0
      %359 = vmatpush.msra.mxu0 0.0
      %360 = vmatpush.msra.mxu0 0.0
      %361 = vmatpush.msra.mxu0 0.0
      %362 = vmatpush.msra.mxu0 0.0
      %363 = vmatpush.msra.mxu0 0.0
      %364 = vmatpush.msra.mxu0 0.0
      %365 = vmatpush.msra.mxu0 0.0
      %366 = vmatpush.msra.mxu0 0.0
      %367 = vmatpush.msra.mxu0 0.0
      %368 = vmatpush.msra.mxu0 0.0
      %369 = vmatpush.msra.mxu0 0.0
      %370 = vmatpush.msra.mxu0 0.0
      %371 = vmatpush.msra.mxu0 0.0
      %372 = vmatpush.msra.mxu0 %v353
      %373 = vmatmul.f32.gmra.mxu0 %v350
      %v374 = vpop.f32.mrf.mxu0
      %v375 = vadd.f32 0.0, %v374
      %376 = vdwg.mxu0
      %377 = vmatpush.msra.mxu0 0.0
      %378 = vmatpush.msra.mxu0 0.0
      %379 = vmatpush.msra.mxu0 0.0
      %380 = vmatpush.msra.mxu0 0.0
      %381 = vmatpush.msra.mxu0 0.0
      %382 = vmatpush.msra.mxu0 0.0
      %383 = vmatpush.msra.mxu0 0.0
      %384 = vmatpush.msra.mxu0 0.0
      %385 = vmatpush.msra.mxu0 0.0
      %386 = vmatpush.msra.mxu0 0.0
      %387 = vmatpush.msra.mxu0 0.0
      %388 = vmatpush.msra.mxu0 0.0
      %389 = vmatpush.msra.mxu0 0.0
      %390 = vmatpush.msra.mxu0 0.0
      %391 = vmatpush.msra.mxu0 0.0
      %392 = vmatpush.msra.mxu0 %v355
      %393 = vmatmul.f32.gmra.mxu0 %v350
      %v394 = vpop.f32.mrf.mxu0
      %v395 = vadd.f32 0.0, %v394
      %396 = vdwg.mxu0
      %v397 = vadd.f32 %v334, %v375
      %v398 = vadd.f32 %v335, %v395
      %s399 = scalar_lea.vmem %s1, 16
      %v400 = vld [vmem:[%s399] sm:$0xff]
      %401 = vst [vmem:[#allocation1] ss:$2 sm:$0xff] %v252
      %v402 = vld.sshfl [vmem:[#allocation1] sm:$0xff pattern:$0x75316420]
      %v403 = vld.sshfl [vmem:[#allocation1 + $0x8] sm:$0xff pattern:$0x75316420]
      %404 = vrot.lane.b32.xlu0 %v402, 15
      %v405 = vpop.permute.xlu0 %404
      %406 = vrot.lane.b32.xlu0 %v403, 15
      %v407 = vpop.permute.xlu0 %406
      %vm408 = vcmask 121856
      %v409 = vsel %vm408, %v405, %v407
      %v412 = vsel %vm408, 0.0, %v405
      %v413 = vperm.slane %v253, 1
      %v414 = vperm.slane %v253, 3
      %v417 = vperm.slane %v413, 1
      %v418 = vperm.slane %v414, 1
      %v419 = vmul.f32 %v412, %v417
      %v420 = vmul.f32 %v409, %v418
      %v422 = vsel %vm283, %v400, 0
      %v425 = vsel %vm287, %v419, 0
      %v428 = vsel %vm287, %v420, 0
      %430 = vmatpush.msra.mxu0 0.0
      %431 = vmatpush.msra.mxu0 0.0
      %432 = vmatpush.msra.mxu0 0.0
      %433 = vmatpush.msra.mxu0 0.0
      %434 = vmatpush.msra.mxu0 0.0
      %435 = vmatpush.msra.mxu0 0.0
      %436 = vmatpush.msra.mxu0 0.0
      %437 = vmatpush.msra.mxu0 0.0
      %438 = vmatpush.msra.mxu0 0.0
      %439 = vmatpush.msra.mxu0 0.0
      %440 = vmatpush.msra.mxu0 0.0
      %441 = vmatpush.msra.mxu0 0.0
      %442 = vmatpush.msra.mxu0 0.0
      %443 = vmatpush.msra.mxu0 0.0
      %444 = vmatpush.msra.mxu0 0.0
      %445 = vmatpush.msra.mxu0 %v425
      %446 = vmatmul.f32.gmra.mxu0 %v422
      %v447 = vpop.f32.mrf.mxu0
      %v448 = vadd.f32 0.0, %v447
      %449 = vdwg.mxu0
      %450 = vmatpush.msra.mxu0 0.0
      %451 = vmatpush.msra.mxu0 0.0
      %452 = vmatpush.msra.mxu0 0.0
      %453 = vmatpush.msra.mxu0 0.0
      %454 = vmatpush.msra.mxu0 0.0
      %455 = vmatpush.msra.mxu0 0.0
      %456 = vmatpush.msra.mxu0 0.0
      %457 = vmatpush.msra.mxu0 0.0
      %458 = vmatpush.msra.mxu0 0.0
      %459 = vmatpush.msra.mxu0 0.0
      %460 = vmatpush.msra.mxu0 0.0
      %461 = vmatpush.msra.mxu0 0.0
      %462 = vmatpush.msra.mxu0 0.0
      %463 = vmatpush.msra.mxu0 0.0
      %464 = vmatpush.msra.mxu0 0.0
      %465 = vmatpush.msra.mxu0 %v428
      %466 = vmatmul.f32.gmra.mxu0 %v422
      %v467 = vpop.f32.mrf.mxu0
      %v468 = vadd.f32 0.0, %v467
      %469 = vdwg.mxu0
      %v470 = vadd.f32 %v397, %v448
      %v471 = vadd.f32 %v398, %v468
      %s472 = scalar_lea.vmem %s1, 24
      %v473 = vld [vmem:[%s472] sm:$0xff]
      %474 = vst [vmem:[#allocation1] ss:$2 sm:$0xff] %v252
      %v475 = vld.sshfl [vmem:[#allocation1] sm:$0xff pattern:$0x75316420]
      %v476 = vld.sshfl [vmem:[#allocation1 + $0x8] sm:$0xff pattern:$0x75316420]
      %477 = vrot.lane.b32.xlu0 %v475, 1
      %v478 = vpop.permute.xlu0 %477
      %479 = vrot.lane.b32.xlu0 %v476, 1
      %v480 = vpop.permute.xlu0 %479
      %vm481 = vcmask 7168
      %v482 = vsel %vm481, %v478, %v480
      %v485 = vsel %vm481, 0.0, %v478
      %v486 = vmul.f32 %v485, %v279
      %v487 = vmul.f32 %v482, %v280
      %v489 = vsel %vm283, %v473, 0
      %v492 = vsel %vm287, %v486, 0
      %v495 = vsel %vm287, %v487, 0
      %497 = vmatpush.msra.mxu0 0.0
      %498 = vmatpush.msra.mxu0 0.0
      %499 = vmatpush.msra.mxu0 0.0
      %500 = vmatpush.msra.mxu0 0.0
      %501 = vmatpush.msra.mxu0 0.0
      %502 = vmatpush.msra.mxu0 0.0
      %503 = vmatpush.msra.mxu0 0.0
      %504 = vmatpush.msra.mxu0 0.0
      %505 = vmatpush.msra.mxu0 0.0
      %506 = vmatpush.msra.mxu0 0.0
      %507 = vmatpush.msra.mxu0 0.0
      %508 = vmatpush.msra.mxu0 0.0
      %509 = vmatpush.msra.mxu0 0.0
      %510 = vmatpush.msra.mxu0 0.0
      %511 = vmatpush.msra.mxu0 0.0
      %512 = vmatpush.msra.mxu0 %v492
      %513 = vmatmul.f32.gmra.mxu0 %v489
      %v514 = vpop.f32.mrf.mxu0
      %v515 = vadd.f32 0.0, %v514
      %516 = vdwg.mxu0
      %517 = vmatpush.msra.mxu0 0.0
      %518 = vmatpush.msra.mxu0 0.0
      %519 = vmatpush.msra.mxu0 0.0
      %520 = vmatpush.msra.mxu0 0.0
      %521 = vmatpush.msra.mxu0 0.0
      %522 = vmatpush.msra.mxu0 0.0
      %523 = vmatpush.msra.mxu0 0.0
      %524 = vmatpush.msra.mxu0 0.0
      %525 = vmatpush.msra.mxu0 0.0
      %526 = vmatpush.msra.mxu0 0.0
      %527 = vmatpush.msra.mxu0 0.0
      %528 = vmatpush.msra.mxu0 0.0
      %529 = vmatpush.msra.mxu0 0.0
      %530 = vmatpush.msra.mxu0 0.0
      %531 = vmatpush.msra.mxu0 0.0
      %532 = vmatpush.msra.mxu0 %v495
      %533 = vmatmul.f32.gmra.mxu0 %v489
      %v534 = vpop.f32.mrf.mxu0
      %v535 = vadd.f32 0.0, %v534
      %536 = vdwg.mxu0
      %v537 = vadd.f32 %v470, %v515
      %v538 = vadd.f32 %v471, %v535
      %s539 = scalar_lea.vmem %s1, 32
      %v540 = vld [vmem:[%s539] sm:$0xff]
      %541 = vst [vmem:[#allocation1] ss:$2 sm:$0xff] %v252
      %v542 = vld.sshfl [vmem:[#allocation1] sm:$0xff pattern:$0x75316420]
      %v543 = vld.sshfl [vmem:[#allocation1 + $0x8] sm:$0xff pattern:$0x75316420]
      %v545 = vsel %vm283, %v540, 0
      %v547 = vsel %vm287, %v542, 0
      %v549 = vsel %vm287, %v543, 0
      %551 = vmatpush.msra.mxu0 0.0
      %552 = vmatpush.msra.mxu0 0.0
      %553 = vmatpush.msra.mxu0 0.0
      %554 = vmatpush.msra.mxu0 0.0
      %555 = vmatpush.msra.mxu0 0.0
      %556 = vmatpush.msra.mxu0 0.0
      %557 = vmatpush.msra.mxu0 0.0
      %558 = vmatpush.msra.mxu0 0.0
      %559 = vmatpush.msra.mxu0 0.0
      %560 = vmatpush.msra.mxu0 0.0
      %561 = vmatpush.msra.mxu0 0.0
      %562 = vmatpush.msra.mxu0 0.0
      %563 = vmatpush.msra.mxu0 0.0
      %564 = vmatpush.msra.mxu0 0.0
      %565 = vmatpush.msra.mxu0 0.0
      %566 = vmatpush.msra.mxu0 %v547
      %567 = vmatmul.f32.gmra.mxu0 %v545
      %v568 = vpop.f32.mrf.mxu0
      %v569 = vadd.f32 0.0, %v568
      %570 = vdwg.mxu0
      %571 = vmatpush.msra.mxu0 0.0
      %572 = vmatpush.msra.mxu0 0.0
      %573 = vmatpush.msra.mxu0 0.0
      %574 = vmatpush.msra.mxu0 0.0
      %575 = vmatpush.msra.mxu0 0.0
      %576 = vmatpush.msra.mxu0 0.0
      %577 = vmatpush.msra.mxu0 0.0
      %578 = vmatpush.msra.mxu0 0.0
      %579 = vmatpush.msra.mxu0 0.0
      %580 = vmatpush.msra.mxu0 0.0
      %581 = vmatpush.msra.mxu0 0.0
      %582 = vmatpush.msra.mxu0 0.0
      %583 = vmatpush.msra.mxu0 0.0
      %584 = vmatpush.msra.mxu0 0.0
      %585 = vmatpush.msra.mxu0 0.0
      %586 = vmatpush.msra.mxu0 %v549
      %587 = vmatmul.f32.gmra.mxu0 %v545
      %v588 = vpop.f32.mrf.mxu0
      %v589 = vadd.f32 0.0, %v588
      %590 = vdwg.mxu0
      %v591 = vadd.f32 %v537, %v569
      %v592 = vadd.f32 %v538, %v589
      %s593 = scalar_lea.vmem %s1, 40
      %v594 = vld [vmem:[%s593] sm:$0xff]
      %595 = vst [vmem:[#allocation1] ss:$2 sm:$0xff] %v252
      %v596 = vld.sshfl [vmem:[#allocation1] sm:$0xff pattern:$0x75316420]
      %v597 = vld.sshfl [vmem:[#allocation1 + $0x8] sm:$0xff pattern:$0x75316420]
      %598 = vrot.lane.b32.xlu0 %v596, 127
      %v599 = vpop.permute.xlu0 %598
      %600 = vrot.lane.b32.xlu0 %v597, 127
      %v601 = vpop.permute.xlu0 %600
      %vm602 = vcmask 1039360
      %v603 = vsel %vm602, %v599, %v601
      %v606 = vsel %vm602, %v601, 0.0
      %v607 = vmul.f32 %v603, %v417
      %v608 = vmul.f32 %v606, %v418
      %v610 = vsel %vm283, %v594, 0
      %v613 = vsel %vm287, %v607, 0
      %v616 = vsel %vm287, %v608, 0
      %618 = vmatpush.msra.mxu0 0.0
      %619 = vmatpush.msra.mxu0 0.0
      %620 = vmatpush.msra.mxu0 0.0
      %621 = vmatpush.msra.mxu0 0.0
      %622 = vmatpush.msra.mxu0 0.0
      %623 = vmatpush.msra.mxu0 0.0
      %624 = vmatpush.msra.mxu0 0.0
      %625 = vmatpush.msra.mxu0 0.0
      %626 = vmatpush.msra.mxu0 0.0
      %627 = vmatpush.msra.mxu0 0.0
      %628 = vmatpush.msra.mxu0 0.0
      %629 = vmatpush.msra.mxu0 0.0
      %630 = vmatpush.msra.mxu0 0.0
      %631 = vmatpush.msra.mxu0 0.0
      %632 = vmatpush.msra.mxu0 0.0
      %633 = vmatpush.msra.mxu0 %v613
      %634 = vmatmul.f32.gmra.mxu0 %v610
      %v635 = vpop.f32.mrf.mxu0
      %v636 = vadd.f32 0.0, %v635
      %637 = vdwg.mxu0
      %638 = vmatpush.msra.mxu0 0.0
      %639 = vmatpush.msra.mxu0 0.0
      %640 = vmatpush.msra.mxu0 0.0
      %641 = vmatpush.msra.mxu0 0.0
      %642 = vmatpush.msra.mxu0 0.0
      %643 = vmatpush.msra.mxu0 0.0
      %644 = vmatpush.msra.mxu0 0.0
      %645 = vmatpush.msra.mxu0 0.0
      %646 = vmatpush.msra.mxu0 0.0
      %647 = vmatpush.msra.mxu0 0.0
      %648 = vmatpush.msra.mxu0 0.0
      %649 = vmatpush.msra.mxu0 0.0
      %650 = vmatpush.msra.mxu0 0.0
      %651 = vmatpush.msra.mxu0 0.0
      %652 = vmatpush.msra.mxu0 0.0
      %653 = vmatpush.msra.mxu0 %v616
      %654 = vmatmul.f32.gmra.mxu0 %v610
      %v655 = vpop.f32.mrf.mxu0
      %v656 = vadd.f32 0.0, %v655
      %657 = vdwg.mxu0
      %v658 = vadd.f32 %v591, %v636
      %v659 = vadd.f32 %v592, %v656
      %s660 = scalar_lea.vmem %s1, 48
      %v661 = vld [vmem:[%s660] sm:$0xff]
      %662 = vst [vmem:[#allocation1] ss:$2 sm:$0xff] %v252
      %v663 = vld.sshfl [vmem:[#allocation1] sm:$0xff pattern:$0x75316420]
      %v664 = vld.sshfl [vmem:[#allocation1 + $0x8] sm:$0xff pattern:$0x75316420]
      %665 = vrot.lane.b32.xlu0 %v663, 113
      %v666 = vpop.permute.xlu0 %665
      %667 = vrot.lane.b32.xlu0 %v664, 113
      %v668 = vpop.permute.xlu0 %667
      %vm669 = vcmask 924672
      %v670 = vsel %vm669, %v666, %v668
      %v673 = vsel %vm669, %v668, 0.0
      %v674 = vmul.f32 %v670, %v279
      %v675 = vmul.f32 %v673, %v280
      %v677 = vsel %vm283, %v661, 0
      %v680 = vsel %vm287, %v674, 0
      %v683 = vsel %vm287, %v675, 0
      %685 = vmatpush.msra.mxu0 0.0
      %686 = vmatpush.msra.mxu0 0.0
      %687 = vmatpush.msra.mxu0 0.0
      %688 = vmatpush.msra.mxu0 0.0
      %689 = vmatpush.msra.mxu0 0.0
      %690 = vmatpush.msra.mxu0 0.0
      %691 = vmatpush.msra.mxu0 0.0
      %692 = vmatpush.msra.mxu0 0.0
      %693 = vmatpush.msra.mxu0 0.0
      %694 = vmatpush.msra.mxu0 0.0
      %695 = vmatpush.msra.mxu0 0.0
      %696 = vmatpush.msra.mxu0 0.0
      %697 = vmatpush.msra.mxu0 0.0
      %698 = vmatpush.msra.mxu0 0.0
      %699 = vmatpush.msra.mxu0 0.0
      %700 = vmatpush.msra.mxu0 %v680
      %701 = vmatmul.f32.gmra.mxu0 %v677
      %v702 = vpop.f32.mrf.mxu0
      %v703 = vadd.f32 0.0, %v702
      %704 = vdwg.mxu0
      %705 = vmatpush.msra.mxu0 0.0
      %706 = vmatpush.msra.mxu0 0.0
      %707 = vmatpush.msra.mxu0 0.0
      %708 = vmatpush.msra.mxu0 0.0
      %709 = vmatpush.msra.mxu0 0.0
      %710 = vmatpush.msra.mxu0 0.0
      %711 = vmatpush.msra.mxu0 0.0
      %712 = vmatpush.msra.mxu0 0.0
      %713 = vmatpush.msra.mxu0 0.0
      %714 = vmatpush.msra.mxu0 0.0
      %715 = vmatpush.msra.mxu0 0.0
      %716 = vmatpush.msra.mxu0 0.0
      %717 = vmatpush.msra.mxu0 0.0
      %718 = vmatpush.msra.mxu0 0.0
      %719 = vmatpush.msra.mxu0 0.0
      %720 = vmatpush.msra.mxu0 %v683
      %721 = vmatmul.f32.gmra.mxu0 %v677
      %v722 = vpop.f32.mrf.mxu0
      %v723 = vadd.f32 0.0, %v722
      %724 = vdwg.mxu0
      %v725 = vadd.f32 %v658, %v703
      %v726 = vadd.f32 %v659, %v723
      %s727 = scalar_lea.vmem %s1, 56
      %v728 = vld [vmem:[%s727] sm:$0xff]
      %729 = vst [vmem:[#allocation1] ss:$2 sm:$0xff] %v252
      %v730 = vld.sshfl [vmem:[#allocation1] sm:$0xff pattern:$0x75316420]
      %v731 = vld.sshfl [vmem:[#allocation1 + $0x8] sm:$0xff pattern:$0x75316420]
      %732 = vrot.lane.b32.xlu0 %v730, 112
      %v733 = vpop.permute.xlu0 %732
      %734 = vrot.lane.b32.xlu0 %v731, 112
      %v735 = vpop.permute.xlu0 %734
      %vm736 = vcmask 916480
      %v737 = vsel %vm736, %v733, %v735
      %v739 = vsel %vm736, %v735, 0.0
      %v741 = vsel %vm283, %v728, 0
      %v743 = vsel %vm287, %v737, 0
      %v746 = vsel %vm287, %v739, 0
      %748 = vmatpush.msra.mxu0 0.0
      %749 = vmatpush.msra.mxu0 0.0
      %750 = vmatpush.msra.mxu0 0.0
      %751 = vmatpush.msra.mxu0 0.0
      %752 = vmatpush.msra.mxu0 0.0
      %753 = vmatpush.msra.mxu0 0.0
      %754 = vmatpush.msra.mxu0 0.0
      %755 = vmatpush.msra.mxu0 0.0
      %756 = vmatpush.msra.mxu0 0.0
      %757 = vmatpush.msra.mxu0 0.0
      %758 = vmatpush.msra.mxu0 0.0
      %759 = vmatpush.msra.mxu0 0.0
      %760 = vmatpush.msra.mxu0 0.0
      %761 = vmatpush.msra.mxu0 0.0
      %762 = vmatpush.msra.mxu0 0.0
      %763 = vmatpush.msra.mxu0 %v743
      %764 = vmatmul.f32.gmra.mxu0 %v741
      %v765 = vpop.f32.mrf.mxu0
      %v766 = vadd.f32 0.0, %v765
      %767 = vdwg.mxu0
      %768 = vmatpush.msra.mxu0 0.0
      %769 = vmatpush.msra.mxu0 0.0
      %770 = vmatpush.msra.mxu0 0.0
      %771 = vmatpush.msra.mxu0 0.0
      %772 = vmatpush.msra.mxu0 0.0
      %773 = vmatpush.msra.mxu0 0.0
      %774 = vmatpush.msra.mxu0 0.0
      %775 = vmatpush.msra.mxu0 0.0
      %776 = vmatpush.msra.mxu0 0.0
      %777 = vmatpush.msra.mxu0 0.0
      %778 = vmatpush.msra.mxu0 0.0
      %779 = vmatpush.msra.mxu0 0.0
      %780 = vmatpush.msra.mxu0 0.0
      %781 = vmatpush.msra.mxu0 0.0
      %782 = vmatpush.msra.mxu0 0.0
      %783 = vmatpush.msra.mxu0 %v746
      %784 = vmatmul.f32.gmra.mxu0 %v741
      %v785 = vpop.f32.mrf.mxu0
      %v786 = vadd.f32 0.0, %v785
      %787 = vdwg.mxu0
      %v788 = vadd.f32 %v725, %v766
      %v789 = vadd.f32 %v726, %v786
      %s790 = scalar_lea.vmem %s1, 64
      %v791 = vld [vmem:[%s790] sm:$0xff]
      %792 = vst [vmem:[#allocation1] ss:$2 sm:$0xff] %v252
      %v793 = vld.sshfl [vmem:[#allocation1] sm:$0xff pattern:$0x75316420]
      %v794 = vld.sshfl [vmem:[#allocation1 + $0x8] sm:$0xff pattern:$0x75316420]
      %795 = vrot.lane.b32.xlu0 %v793, 111
      %v796 = vpop.permute.xlu0 %795
      %797 = vrot.lane.b32.xlu0 %v794, 111
      %v798 = vpop.permute.xlu0 %797
      %vm799 = vcmask 908288
      %v800 = vsel %vm799, %v796, %v798
      %v803 = vsel %vm799, %v798, 0.0
      %v804 = vmul.f32 %v800, %v417
      %v805 = vmul.f32 %v803, %v418
      %v807 = vsel %vm283, %v791, 0
      %v810 = vsel %vm287, %v804, 0
      %v813 = vsel %vm287, %v805, 0
      %815 = vmatpush.msra.mxu0 0.0
      %816 = vmatpush.msra.mxu0 0.0
      %817 = vmatpush.msra.mxu0 0.0
      %818 = vmatpush.msra.mxu0 0.0
      %819 = vmatpush.msra.mxu0 0.0
      %820 = vmatpush.msra.mxu0 0.0
      %821 = vmatpush.msra.mxu0 0.0
      %822 = vmatpush.msra.mxu0 0.0
      %823 = vmatpush.msra.mxu0 0.0
      %824 = vmatpush.msra.mxu0 0.0
      %825 = vmatpush.msra.mxu0 0.0
      %826 = vmatpush.msra.mxu0 0.0
      %827 = vmatpush.msra.mxu0 0.0
      %828 = vmatpush.msra.mxu0 0.0
      %829 = vmatpush.msra.mxu0 0.0
      %830 = vmatpush.msra.mxu0 %v810
      %831 = vmatmul.f32.gmra.mxu0 %v807
      %v832 = vpop.f32.mrf.mxu0
      %v833 = vadd.f32 0.0, %v832
      %834 = vdwg.mxu0
      %835 = vmatpush.msra.mxu0 0.0
      %836 = vmatpush.msra.mxu0 0.0
      %837 = vmatpush.msra.mxu0 0.0
      %838 = vmatpush.msra.mxu0 0.0
      %839 = vmatpush.msra.mxu0 0.0
      %840 = vmatpush.msra.mxu0 0.0
      %841 = vmatpush.msra.mxu0 0.0
      %842 = vmatpush.msra.mxu0 0.0
      %843 = vmatpush.msra.mxu0 0.0
      %844 = vmatpush.msra.mxu0 0.0
      %845 = vmatpush.msra.mxu0 0.0
      %846 = vmatpush.msra.mxu0 0.0
      %847 = vmatpush.msra.mxu0 0.0
      %848 = vmatpush.msra.mxu0 0.0
      %849 = vmatpush.msra.mxu0 0.0
      %850 = vmatpush.msra.mxu0 %v813
      %851 = vmatmul.f32.gmra.mxu0 %v807
      %v852 = vpop.f32.mrf.mxu0
      %v853 = vadd.f32 0.0, %v852
      %854 = vdwg.mxu0
      %v855 = vadd.f32 %v788, %v833
      %v856 = vadd.f32 %v789, %v853
      %v857 = vmax.f32 %v855, 0.0
      %v858 = vmax.f32 %v856, 0.0
      %861 = vrot.lane.b32.xlu0 %v857, 127
      %v862 = vpop.permute.xlu0 %861
      %863 = vrot.lane.b32.xlu0 %v858, 127
      %v864 = vpop.permute.xlu0 %863
      %v865 = vsel %vm602, %v862, %v864
      %v868 = vsel %vm602, %v864, 0.0
      %v869 = vmul.f32 %v865, %v417
      %v870 = vmul.f32 %v868, %v418
      %871 = vrot.lane.b32.xlu0 %v857, 112
      %v872 = vpop.permute.xlu0 %871
      %873 = vrot.lane.b32.xlu0 %v858, 112
      %v874 = vpop.permute.xlu0 %873
      %v875 = vsel %vm736, %v872, %v874
      %v878 = vsel %vm736, %v874, 0.0
      %879 = vrot.lane.b32.xlu0 %v857, 111
      %v880 = vpop.permute.xlu0 %879
      %881 = vrot.lane.b32.xlu0 %v858, 111
      %v882 = vpop.permute.xlu0 %881
      %v883 = vsel %vm799, %v880, %v882
      %v886 = vsel %vm799, %v882, 0.0
      %v887 = vmul.f32 %v883, %v417
      %v888 = vmul.f32 %v886, %v418
      %v889 = vld [vmem:[%s4] sm:$0xf]
      %s890 = scalar_lea.vmem %s3, 16
      %v891 = vld [vmem:[%s890] sm:$0xf]
      %893 = vset.pattern.permute.xlu0 0
      %894 = vperm.xlu0 %893, %v889
      %v895 = vpop.permute.xlu0 %894
      %vm897 = vcmask 64512
      %v899 = vsel %vm897, %v891, 0
      %901 = vmatpush.msra.mxu0 0.0
      %902 = vmatpush.msra.mxu0 0.0
      %903 = vmatpush.msra.mxu0 0.0
      %904 = vmatpush.msra.mxu0 0.0
      %905 = vmatpush.msra.mxu0 0.0
      %906 = vmatpush.msra.mxu0 0.0
      %907 = vmatpush.msra.mxu0 0.0
      %908 = vmatpush.msra.mxu0 0.0
      %909 = vmatpush.msra.mxu0 0.0
      %910 = vmatpush.msra.mxu0 0.0
      %911 = vmatpush.msra.mxu0 0.0
      %912 = vmatpush.msra.mxu0 0.0
      %913 = vmatpush.msra.mxu0 0.0
      %914 = vmatpush.msra.mxu0 0.0
      %915 = vmatpush.msra.mxu0 0.0
      %916 = vmatpush.msra.mxu0 %v857
      %917 = vmatmul.f32.gmra.mxu0 %v899
      %v918 = vpop.f32.mrf.mxu0
      %v919 = vadd.f32 %v895, %v918
      %920 = vdwg.mxu0
      %921 = vmatpush.msra.mxu0 0.0
      %922 = vmatpush.msra.mxu0 0.0
      %923 = vmatpush.msra.mxu0 0.0
      %924 = vmatpush.msra.mxu0 0.0
      %925 = vmatpush.msra.mxu0 0.0
      %926 = vmatpush.msra.mxu0 0.0
      %927 = vmatpush.msra.mxu0 0.0
      %928 = vmatpush.msra.mxu0 0.0
      %929 = vmatpush.msra.mxu0 0.0
      %930 = vmatpush.msra.mxu0 0.0
      %931 = vmatpush.msra.mxu0 0.0
      %932 = vmatpush.msra.mxu0 0.0
      %933 = vmatpush.msra.mxu0 0.0
      %934 = vmatpush.msra.mxu0 0.0
      %935 = vmatpush.msra.mxu0 0.0
      %936 = vmatpush.msra.mxu0 %v858
      %937 = vmatmul.f32.gmra.mxu0 %v899
      %v938 = vpop.f32.mrf.mxu0
      %v939 = vadd.f32 %v895, %v938
      %940 = vdwg.mxu0
      %s941 = scalar_lea.vmem %s3, 12
      %v942 = vld [vmem:[%s941] sm:$0xf]
      %s943 = scalar_lea.vmem %s3, 20
      %v944 = vld [vmem:[%s943] sm:$0xf]
      %v946 = vsel %vm897, %v944, 0
      %948 = vmatpush.msra.mxu0 0.0
      %949 = vmatpush.msra.mxu0 0.0
      %950 = vmatpush.msra.mxu0 0.0
      %951 = vmatpush.msra.mxu0 0.0
      %952 = vmatpush.msra.mxu0 0.0
      %953 = vmatpush.msra.mxu0 0.0
      %954 = vmatpush.msra.mxu0 0.0
      %955 = vmatpush.msra.mxu0 0.0
      %956 = vmatpush.msra.mxu0 0.0
      %957 = vmatpush.msra.mxu0 0.0
      %958 = vmatpush.msra.mxu0 0.0
      %959 = vmatpush.msra.mxu0 0.0
      %960 = vmatpush.msra.mxu0 0.0
      %961 = vmatpush.msra.mxu0 0.0
      %962 = vmatpush.msra.mxu0 0.0
      %963 = vmatpush.msra.mxu0 %v857
      %964 = vmatmul.f32.gmra.mxu0 %v946
      %v965 = vpop.f32.mrf.mxu0
      %v966 = vadd.f32 0.0, %v965
      %967 = vdwg.mxu0
      %968 = vmatpush.msra.mxu0 0.0
      %969 = vmatpush.msra.mxu0 0.0
      %970 = vmatpush.msra.mxu0 0.0
      %971 = vmatpush.msra.mxu0 0.0
      %972 = vmatpush.msra.mxu0 0.0
      %973 = vmatpush.msra.mxu0 0.0
      %974 = vmatpush.msra.mxu0 0.0
      %975 = vmatpush.msra.mxu0 0.0
      %976 = vmatpush.msra.mxu0 0.0
      %977 = vmatpush.msra.mxu0 0.0
      %978 = vmatpush.msra.mxu0 0.0
      %979 = vmatpush.msra.mxu0 0.0
      %980 = vmatpush.msra.mxu0 0.0
      %981 = vmatpush.msra.mxu0 0.0
      %982 = vmatpush.msra.mxu0 0.0
      %983 = vmatpush.msra.mxu0 %v858
      %984 = vmatmul.f32.gmra.mxu0 %v946
      %v985 = vpop.f32.mrf.mxu0
      %v986 = vadd.f32 0.0, %v985
      %987 = vdwg.mxu0
      %v989 = vsel %vm897, %v942, 0
      %991 = vmatpush.msra.mxu0 0.0
      %992 = vmatpush.msra.mxu0 0.0
      %993 = vmatpush.msra.mxu0 0.0
      %994 = vmatpush.msra.mxu0 0.0
      %995 = vmatpush.msra.mxu0 0.0
      %996 = vmatpush.msra.mxu0 0.0
      %997 = vmatpush.msra.mxu0 0.0
      %998 = vmatpush.msra.mxu0 0.0
      %999 = vmatpush.msra.mxu0 0.0
      %1000 = vmatpush.msra.mxu0 0.0
      %1001 = vmatpush.msra.mxu0 0.0
      %1002 = vmatpush.msra.mxu0 0.0
      %1003 = vmatpush.msra.mxu0 0.0
      %1004 = vmatpush.msra.mxu0 0.0
      %1005 = vmatpush.msra.mxu0 0.0
      %1006 = vmatpush.msra.mxu0 %v869
      %1007 = vmatmul.f32.gmra.mxu0 %v989
      %v1008 = vpop.f32.mrf.mxu0
      %v1009 = vadd.f32 %v966, %v1008
      %1010 = vdwg.mxu0
      %1011 = vmatpush.msra.mxu0 0.0
      %1012 = vmatpush.msra.mxu0 0.0
      %1013 = vmatpush.msra.mxu0 0.0
      %1014 = vmatpush.msra.mxu0 0.0
      %1015 = vmatpush.msra.mxu0 0.0
      %1016 = vmatpush.msra.mxu0 0.0
      %1017 = vmatpush.msra.mxu0 0.0
      %1018 = vmatpush.msra.mxu0 0.0
      %1019 = vmatpush.msra.mxu0 0.0
      %1020 = vmatpush.msra.mxu0 0.0
      %1021 = vmatpush.msra.mxu0 0.0
      %1022 = vmatpush.msra.mxu0 0.0
      %1023 = vmatpush.msra.mxu0 0.0
      %1024 = vmatpush.msra.mxu0 0.0
      %1025 = vmatpush.msra.mxu0 0.0
      %1026 = vmatpush.msra.mxu0 %v870
      %1027 = vmatmul.f32.gmra.mxu0 %v989
      %v1028 = vpop.f32.mrf.mxu0
      %v1029 = vadd.f32 %v986, %v1028
      %1030 = vdwg.mxu0
      %v1031 = vadd.f32 %v1009, %v895
      %v1032 = vadd.f32 %v1029, %v895
      %s1033 = scalar_lea.vmem %s3, 4
      %v1034 = vld [vmem:[%s1033] sm:$0xf]
      %s1035 = scalar_lea.vmem %s3, 28
      %v1036 = vld [vmem:[%s1035] sm:$0xf]
      %v1038 = vsel %vm897, %v1036, 0
      %1040 = vmatpush.msra.mxu0 0.0
      %1041 = vmatpush.msra.mxu0 0.0
      %1042 = vmatpush.msra.mxu0 0.0
      %1043 = vmatpush.msra.mxu0 0.0
      %1044 = vmatpush.msra.mxu0 0.0
      %1045 = vmatpush.msra.mxu0 0.0
      %1046 = vmatpush.msra.mxu0 0.0
      %1047 = vmatpush.msra.mxu0 0.0
      %1048 = vmatpush.msra.mxu0 0.0
      %1049 = vmatpush.msra.mxu0 0.0
      %1050 = vmatpush.msra.mxu0 0.0
      %1051 = vmatpush.msra.mxu0 0.0
      %1052 = vmatpush.msra.mxu0 0.0
      %1053 = vmatpush.msra.mxu0 0.0
      %1054 = vmatpush.msra.mxu0 0.0
      %1055 = vmatpush.msra.mxu0 %v857
      %1056 = vmatmul.f32.gmra.mxu0 %v1038
      %v1057 = vpop.f32.mrf.mxu0
      %v1058 = vadd.f32 0.0, %v1057
      %1059 = vdwg.mxu0
      %1060 = vmatpush.msra.mxu0 0.0
      %1061 = vmatpush.msra.mxu0 0.0
      %1062 = vmatpush.msra.mxu0 0.0
      %1063 = vmatpush.msra.mxu0 0.0
      %1064 = vmatpush.msra.mxu0 0.0
      %1065 = vmatpush.msra.mxu0 0.0
      %1066 = vmatpush.msra.mxu0 0.0
      %1067 = vmatpush.msra.mxu0 0.0
      %1068 = vmatpush.msra.mxu0 0.0
      %1069 = vmatpush.msra.mxu0 0.0
      %1070 = vmatpush.msra.mxu0 0.0
      %1071 = vmatpush.msra.mxu0 0.0
      %1072 = vmatpush.msra.mxu0 0.0
      %1073 = vmatpush.msra.mxu0 0.0
      %1074 = vmatpush.msra.mxu0 0.0
      %1075 = vmatpush.msra.mxu0 %v858
      %1076 = vmatmul.f32.gmra.mxu0 %v1038
      %v1077 = vpop.f32.mrf.mxu0
      %v1078 = vadd.f32 0.0, %v1077
      %1079 = vdwg.mxu0
      %v1081 = vsel %vm897, %v1034, 0
      %1083 = vmatpush.msra.mxu0 0.0
      %1084 = vmatpush.msra.mxu0 0.0
      %1085 = vmatpush.msra.mxu0 0.0
      %1086 = vmatpush.msra.mxu0 0.0
      %1087 = vmatpush.msra.mxu0 0.0
      %1088 = vmatpush.msra.mxu0 0.0
      %1089 = vmatpush.msra.mxu0 0.0
      %1090 = vmatpush.msra.mxu0 0.0
      %1091 = vmatpush.msra.mxu0 0.0
      %1092 = vmatpush.msra.mxu0 0.0
      %1093 = vmatpush.msra.mxu0 0.0
      %1094 = vmatpush.msra.mxu0 0.0
      %1095 = vmatpush.msra.mxu0 0.0
      %1096 = vmatpush.msra.mxu0 0.0
      %1097 = vmatpush.msra.mxu0 0.0
      %1098 = vmatpush.msra.mxu0 %v875
      %1099 = vmatmul.f32.gmra.mxu0 %v1081
      %v1100 = vpop.f32.mrf.mxu0
      %v1101 = vadd.f32 %v1058, %v1100
      %1102 = vdwg.mxu0
      %1103 = vmatpush.msra.mxu0 0.0
      %1104 = vmatpush.msra.mxu0 0.0
      %1105 = vmatpush.msra.mxu0 0.0
      %1106 = vmatpush.msra.mxu0 0.0
      %1107 = vmatpush.msra.mxu0 0.0
      %1108 = vmatpush.msra.mxu0 0.0
      %1109 = vmatpush.msra.mxu0 0.0
      %1110 = vmatpush.msra.mxu0 0.0
      %1111 = vmatpush.msra.mxu0 0.0
      %1112 = vmatpush.msra.mxu0 0.0
      %1113 = vmatpush.msra.mxu0 0.0
      %1114 = vmatpush.msra.mxu0 0.0
      %1115 = vmatpush.msra.mxu0 0.0
      %1116 = vmatpush.msra.mxu0 0.0
      %1117 = vmatpush.msra.mxu0 0.0
      %1118 = vmatpush.msra.mxu0 %v878
      %1119 = vmatmul.f32.gmra.mxu0 %v1081
      %v1120 = vpop.f32.mrf.mxu0
      %v1121 = vadd.f32 %v1078, %v1120
      %1122 = vdwg.mxu0
      %v1123 = vadd.f32 %v1101, %v895
      %v1124 = vadd.f32 %v1121, %v895
      %v1125 = vld [vmem:[%s3] sm:$0xf]
      %s1126 = scalar_lea.vmem %s3, 8
      %v1127 = vld [vmem:[%s1126] sm:$0xf]
      %v1129 = vsel %vm897, %v1127, 0
      %1131 = vmatpush.msra.mxu0 0.0
      %1132 = vmatpush.msra.mxu0 0.0
      %1133 = vmatpush.msra.mxu0 0.0
      %1134 = vmatpush.msra.mxu0 0.0
      %1135 = vmatpush.msra.mxu0 0.0
      %1136 = vmatpush.msra.mxu0 0.0
      %1137 = vmatpush.msra.mxu0 0.0
      %1138 = vmatpush.msra.mxu0 0.0
      %1139 = vmatpush.msra.mxu0 0.0
      %1140 = vmatpush.msra.mxu0 0.0
      %1141 = vmatpush.msra.mxu0 0.0
      %1142 = vmatpush.msra.mxu0 0.0
      %1143 = vmatpush.msra.mxu0 0.0
      %1144 = vmatpush.msra.mxu0 0.0
      %1145 = vmatpush.msra.mxu0 0.0
      %1146 = vmatpush.msra.mxu0 %v875
      %1147 = vmatmul.f32.gmra.mxu0 %v1129
      %v1148 = vpop.f32.mrf.mxu0
      %v1149 = vadd.f32 0.0, %v1148
      %1150 = vdwg.mxu0
      %1151 = vmatpush.msra.mxu0 0.0
      %1152 = vmatpush.msra.mxu0 0.0
      %1153 = vmatpush.msra.mxu0 0.0
      %1154 = vmatpush.msra.mxu0 0.0
      %1155 = vmatpush.msra.mxu0 0.0
      %1156 = vmatpush.msra.mxu0 0.0
      %1157 = vmatpush.msra.mxu0 0.0
      %1158 = vmatpush.msra.mxu0 0.0
      %1159 = vmatpush.msra.mxu0 0.0
      %1160 = vmatpush.msra.mxu0 0.0
      %1161 = vmatpush.msra.mxu0 0.0
      %1162 = vmatpush.msra.mxu0 0.0
      %1163 = vmatpush.msra.mxu0 0.0
      %1164 = vmatpush.msra.mxu0 0.0
      %1165 = vmatpush.msra.mxu0 0.0
      %1166 = vmatpush.msra.mxu0 %v878
      %1167 = vmatmul.f32.gmra.mxu0 %v1129
      %v1168 = vpop.f32.mrf.mxu0
      %v1169 = vadd.f32 0.0, %v1168
      %1170 = vdwg.mxu0
      %v1172 = vsel %vm897, %v1125, 0
      %1174 = vmatpush.msra.mxu0 0.0
      %1175 = vmatpush.msra.mxu0 0.0
      %1176 = vmatpush.msra.mxu0 0.0
      %1177 = vmatpush.msra.mxu0 0.0
      %1178 = vmatpush.msra.mxu0 0.0
      %1179 = vmatpush.msra.mxu0 0.0
      %1180 = vmatpush.msra.mxu0 0.0
      %1181 = vmatpush.msra.mxu0 0.0
      %1182 = vmatpush.msra.mxu0 0.0
      %1183 = vmatpush.msra.mxu0 0.0
      %1184 = vmatpush.msra.mxu0 0.0
      %1185 = vmatpush.msra.mxu0 0.0
      %1186 = vmatpush.msra.mxu0 0.0
      %1187 = vmatpush.msra.mxu0 0.0
      %1188 = vmatpush.msra.mxu0 0.0
      %1189 = vmatpush.msra.mxu0 %v887
      %1190 = vmatmul.f32.gmra.mxu0 %v1172
      %v1191 = vpop.f32.mrf.mxu0
      %v1192 = vadd.f32 %v1149, %v1191
      %1193 = vdwg.mxu0
      %1194 = vmatpush.msra.mxu0 0.0
      %1195 = vmatpush.msra.mxu0 0.0
      %1196 = vmatpush.msra.mxu0 0.0
      %1197 = vmatpush.msra.mxu0 0.0
      %1198 = vmatpush.msra.mxu0 0.0
      %1199 = vmatpush.msra.mxu0 0.0
      %1200 = vmatpush.msra.mxu0 0.0
      %1201 = vmatpush.msra.mxu0 0.0
      %1202 = vmatpush.msra.mxu0 0.0
      %1203 = vmatpush.msra.mxu0 0.0
      %1204 = vmatpush.msra.mxu0 0.0
      %1205 = vmatpush.msra.mxu0 0.0
      %1206 = vmatpush.msra.mxu0 0.0
      %1207 = vmatpush.msra.mxu0 0.0
      %1208 = vmatpush.msra.mxu0 0.0
      %1209 = vmatpush.msra.mxu0 %v888
      %1210 = vmatmul.f32.gmra.mxu0 %v1172
      %v1211 = vpop.f32.mrf.mxu0
      %v1212 = vadd.f32 %v1169, %v1211
      %1213 = vdwg.mxu0
      %s1214 = scalar_lea.vmem %s3, 24
      %v1215 = vld [vmem:[%s1214] sm:$0xf]
      %v1217 = vsel %vm897, %v1215, 0
      %1219 = vmatpush.msra.mxu0 0.0
      %1220 = vmatpush.msra.mxu0 0.0
      %1221 = vmatpush.msra.mxu0 0.0
      %1222 = vmatpush.msra.mxu0 0.0
      %1223 = vmatpush.msra.mxu0 0.0
      %1224 = vmatpush.msra.mxu0 0.0
      %1225 = vmatpush.msra.mxu0 0.0
      %1226 = vmatpush.msra.mxu0 0.0
      %1227 = vmatpush.msra.mxu0 0.0
      %1228 = vmatpush.msra.mxu0 0.0
      %1229 = vmatpush.msra.mxu0 0.0
      %1230 = vmatpush.msra.mxu0 0.0
      %1231 = vmatpush.msra.mxu0 0.0
      %1232 = vmatpush.msra.mxu0 0.0
      %1233 = vmatpush.msra.mxu0 0.0
      %1234 = vmatpush.msra.mxu0 %v869
      %1235 = vmatmul.f32.gmra.mxu0 %v1217
      %v1236 = vpop.f32.mrf.mxu0
      %v1237 = vadd.f32 0.0, %v1236
      %1238 = vdwg.mxu0
      %1239 = vmatpush.msra.mxu0 0.0
      %1240 = vmatpush.msra.mxu0 0.0
      %1241 = vmatpush.msra.mxu0 0.0
      %1242 = vmatpush.msra.mxu0 0.0
      %1243 = vmatpush.msra.mxu0 0.0
      %1244 = vmatpush.msra.mxu0 0.0
      %1245 = vmatpush.msra.mxu0 0.0
      %1246 = vmatpush.msra.mxu0 0.0
      %1247 = vmatpush.msra.mxu0 0.0
      %1248 = vmatpush.msra.mxu0 0.0
      %1249 = vmatpush.msra.mxu0 0.0
      %1250 = vmatpush.msra.mxu0 0.0
      %1251 = vmatpush.msra.mxu0 0.0
      %1252 = vmatpush.msra.mxu0 0.0
      %1253 = vmatpush.msra.mxu0 0.0
      %1254 = vmatpush.msra.mxu0 %v870
      %1255 = vmatmul.f32.gmra.mxu0 %v1217
      %v1256 = vpop.f32.mrf.mxu0
      %v1257 = vadd.f32 0.0, %v1256
      %1258 = vdwg.mxu0
      %v1259 = vadd.f32 %v1192, %v1237
      %v1260 = vadd.f32 %v1212, %v1257
      %s1261 = scalar_lea.vmem %s3, 32
      %v1262 = vld [vmem:[%s1261] sm:$0xf]
      %v1264 = vsel %vm897, %v1262, 0
      %1266 = vmatpush.msra.mxu0 0.0
      %1267 = vmatpush.msra.mxu0 0.0
      %1268 = vmatpush.msra.mxu0 0.0
      %1269 = vmatpush.msra.mxu0 0.0
      %1270 = vmatpush.msra.mxu0 0.0
      %1271 = vmatpush.msra.mxu0 0.0
      %1272 = vmatpush.msra.mxu0 0.0
      %1273 = vmatpush.msra.mxu0 0.0
      %1274 = vmatpush.msra.mxu0 0.0
      %1275 = vmatpush.msra.mxu0 0.0
      %1276 = vmatpush.msra.mxu0 0.0
      %1277 = vmatpush.msra.mxu0 0.0
      %1278 = vmatpush.msra.mxu0 0.0
      %1279 = vmatpush.msra.mxu0 0.0
      %1280 = vmatpush.msra.mxu0 0.0
      %1281 = vmatpush.msra.mxu0 %v857
      %1282 = vmatmul.f32.gmra.mxu0 %v1264
      %v1283 = vpop.f32.mrf.mxu0
      %v1284 = vadd.f32 0.0, %v1283
      %1285 = vdwg.mxu0
      %1286 = vmatpush.msra.mxu0 0.0
      %1287 = vmatpush.msra.mxu0 0.0
      %1288 = vmatpush.msra.mxu0 0.0
      %1289 = vmatpush.msra.mxu0 0.0
      %1290 = vmatpush.msra.mxu0 0.0
      %1291 = vmatpush.msra.mxu0 0.0
      %1292 = vmatpush.msra.mxu0 0.0
      %1293 = vmatpush.msra.mxu0 0.0
      %1294 = vmatpush.msra.mxu0 0.0
      %1295 = vmatpush.msra.mxu0 0.0
      %1296 = vmatpush.msra.mxu0 0.0
      %1297 = vmatpush.msra.mxu0 0.0
      %1298 = vmatpush.msra.mxu0 0.0
      %1299 = vmatpush.msra.mxu0 0.0
      %1300 = vmatpush.msra.mxu0 0.0
      %1301 = vmatpush.msra.mxu0 %v858
      %1302 = vmatmul.f32.gmra.mxu0 %v1264
      %v1303 = vpop.f32.mrf.mxu0
      %v1304 = vadd.f32 0.0, %v1303
      %1305 = vdwg.mxu0
      %v1306 = vadd.f32 %v1259, %v1284
      %v1307 = vadd.f32 %v1260, %v1304
      %v1308 = vadd.f32 %v1306, %v895
      %v1309 = vadd.f32 %v1307, %v895
      %v1310 = vmax.f32 %v919, 0.0
      %v1311 = vmax.f32 %v939, 0.0
      %v1314 = vrot.slane %v1311, 4
      %v1315 = vsel %vm287, %v1310, %v1314
      %1317 = vst [vmem:[%s251] sm:$0xff] %v1315
      %v1318 = vmax.f32 %v1031, 0.0
      %v1319 = vmax.f32 %v1032, 0.0
      %v1322 = vrot.slane %v1319, 4
      %v1323 = vsel %vm287, %v1318, %v1322
      %s1325 = scalar_lea.vmem %s251, 8
      %1326 = vst [vmem:[%s1325] sm:$0xff] %v1323
      %v1327 = vmax.f32 %v1123, 0.0
      %v1328 = vmax.f32 %v1124, 0.0
      %v1331 = vrot.slane %v1328, 4
      %v1332 = vsel %vm287, %v1327, %v1331
      %s1334 = scalar_lea.vmem %s251, 16
      %1335 = vst [vmem:[%s1334] sm:$0xff] %v1332
      %v1336 = vmax.f32 %v1308, 0.0
      %v1337 = vmax.f32 %v1309, 0.0
      %v1340 = vrot.slane %v1337, 4
      %v1341 = vsel %vm287, %v1336, %v1340
      %s1343 = scalar_lea.vmem %s251, 24
      %1344 = vst [vmem:[%s1343] sm:$0xff] %v1341
      %p1345 = scmp.lt.s32.totalorder %s17, 1
      %s1346 = scalar_select %p1345, %s17, 1
      %s1347 = smul.addr %s1346, 8
      %s1348 = smul.addr %s1347, 4
      %s1349 = scalar_lea.vmem %s6, %s1348
      // Predicated region
      $region45: #{decoder_block_forward.1} parent=43 // pred_check
        %p1350 = pneg %p166
      $region46: #{decoder_block_forward.1} parent=43 // pred_check_branch
        %1352 = sbr.rel (%p1350) target = $region48
      $region47: #{decoder_block_forward.1} parent=43 // pred_region
        _
      $region48: #{decoder_block_forward.1} parent=43 // pred_fallthru
        _
    $region44: #{decoder_block_forward.1} parent=5 // pred_fallthru
      _
    %p1353 = scmp.le.s32.totalorder 2, %s12
    // Predicated region
    $region49: #{decoder_block_forward.1} parent=5 // pred_check
      %p1354 = pneg %p1353
    $region50: #{decoder_block_forward.1} parent=5 // pred_check_branch
      %1356 = sbr.rel (%p1354) target = $region52
    $region51: #{decoder_block_forward.1} parent=5 // pred_region
      %s1357 = ssub.s32 %s12, 2
      // Predicated region
      $region53: #{decoder_block_forward.1} parent=51 // pred_check
        %p1358 = pneg %p172
      $region54: #{decoder_block_forward.1} parent=51 // pred_check_branch
        %1360 = sbr.rel (%p1358) target = $region56
      $region55: #{decoder_block_forward.1} parent=51 // pred_region
        %p1361 = scmp.lt.s32.totalorder %s18, 1
        %s1362 = scalar_select %p1361, %s18, 1
        %s1363 = smul.addr %s1362, 8
        %s1364 = smul.addr %s1363, 4
        %s1365 = scalar_lea.vmem %s6, %s1364
      $region56: #{decoder_block_forward.1} parent=51 // pred_fallthru
        _
    $region52: #{decoder_block_forward.1} parent=5 // pred_fallthru
      _
  $region6: #{decoder_block_forward.1} parent=0 // loop_footer
    %s16 = sadd.s32 1, %s12
  $region7: #{decoder_block_forward.1} parent=0 // loop_footer_branch
    %11 = sbr.rel target = $region3
  $region8: #{decoder_block_forward.1} parent=0 // loop_exit
    _

</llo_original>
